<compile_context>
chip_gen: v6e
topology: v6e:2x2x1
jax: 0.10.0
libtpu: 0.0.40
codegen_flags: <defaults>
</compile_context>

<pallas_src>
import jax
import jax.numpy as jnp
from jax import lax
from jax.experimental import pallas as pl
from jax.experimental.pallas import tpu as pltpu


def rnn_dfa_kernel(x_ref, wih_ref, whh_ref, bh_ref, wout_ref, bout_ref,
                   tidx_ref, mmask_ref, pred_ref, hid_ref, dfa_ref):
    # x_ref is the time-major flattened input: row t*B + b <-> (t, b).
    SB, V = x_ref.shape
    H = whh_ref.shape[0]
    Q = tidx_ref.shape[0]
    B = hid_ref.shape[0]
    S = SB // B

    # ---- hoisted loads / broadcasts (issued once, not per step) -------------
    x_tm = x_ref[...]                                             # (S*B, V) time-major
    w_ih = wih_ref[...]                                           # (V, H)
    w_hh = whh_ref[...]                                           # (H, H)
    b_h = bh_ref[...]                                             # (1, H)
    w_out = wout_ref[...]                                         # (H, V)
    b_out = bout_ref[...]                                         # (1, V)
    t_idx = tidx_ref[...]                                         # (Q, V) float-coded ints
    m_mask = mmask_ref[...]                                       # (Q, V)

    # ---- input projection for ALL timesteps: one batched MXU matmul, off the
    #      h-recurrence chain (bias folded in; stays 2D time-major) -----------
    xw_all = jnp.dot(x_tm, w_ih, preferred_element_type=jnp.float32) + b_h   # (S*B, H)

    # ---- argmax(x, -1) as one-hot for ALL timesteps (vectorized, off-chain);
    #      first-max-wins, matching torch.argmax ------------------------------
    iota_v = lax.broadcasted_iota(jnp.int32, (SB, V), 1).astype(jnp.float32)
    xmax = jnp.max(x_tm, axis=-1, keepdims=True)
    xidx = jnp.min(jnp.where(x_tm == xmax, iota_v, jnp.float32(V)),
                   axis=-1, keepdims=True)                        # (S*B, 1)
    x_oh = (iota_v == xidx).astype(jnp.float32)                   # (S*B, V)

    # ---- pre-contract symbols with the transition table:
    #      rows_all[t*B+b, q] = T_idx[q, x_idx[t, b]]  (one batched matmul) ----
    rows_all = lax.dot_general(
        x_oh, t_idx,
        dimension_numbers=(((1,), (1,)), ((), ())),
        preferred_element_type=jnp.float32)                       # (S*B, Q)

    # ---- DFA walk: sequential in state_oh only; VPU mul + tiny XLU reduce +
    #      compare per step.  Mask lookups are batched AFTER the walk. --------
    iota_q = lax.broadcasted_iota(jnp.int32, (B, Q), 1).astype(jnp.float32)
    state_oh = (iota_q == 0.0).astype(jnp.float32)                # start state 0, (B, Q)
    state_slab = []
    for t in range(S):                                            # fully unrolled (S static)
        nxt = jnp.sum(state_oh * rows_all[t * B:(t + 1) * B, :],
                      axis=-1, keepdims=True)                     # (B, 1)
        state_oh = (iota_q == nxt).astype(jnp.float32)            # (B, Q)
        state_slab.append(state_oh)

    dfa_ref[...] = jnp.sum(state_oh * iota_q, axis=-1,
                           keepdims=True).astype(jnp.int32)       # final DFA state

    # ONE batched mask lookup: (S*B, Q) @ (Q, V)
    states_all = jnp.concatenate(state_slab, axis=0)              # (S*B, Q) time-major
    masks_all = jnp.dot(states_all, m_mask,
                        preferred_element_type=jnp.float32)       # (S*B, V)

    # ---- Elman recurrence: ONLY h @ W_hh + tanh sit on the serial chain ------
    h = jnp.zeros((B, H), jnp.float32)
    h_slab = []
    for t in range(S):                                            # fully unrolled
        h = jnp.tanh(xw_all[t * B:(t + 1) * B, :]
                     + jnp.dot(h, w_hh, preferred_element_type=jnp.float32))
        h_slab.append(h)
    hid_ref[...] = h

    # ---- batched output head + softmax + mask: one matmul, one softmax,
    #      one VPU multiply, one full-ref store --------------------------------
    h_all = jnp.concatenate(h_slab, axis=0)                       # (S*B, H) time-major
    logits = jnp.dot(h_all, w_out, preferred_element_type=jnp.float32) + b_out
    z = logits - jnp.max(logits, axis=-1, keepdims=True)          # kept for safety
    e = jnp.exp(z)
    s = jnp.sum(e, axis=-1, keepdims=True)
    r = pl.reciprocal(s, approx=True)                             # EUP
    r = r * (2.0 - s * r)                                         # one Newton step -> f32 accuracy
    pred_ref[...] = (e * r) * masks_all                           # (S*B, V) time-major


def rnn_with_constraints_forward(x, params):
    """x: (B, S, V) float32. Returns (pred_sym (B,S,V), (hidden (B,H), dfa_state (B,)))."""
    W_ih, W_hh, b_h, W_out, b_out, T_idx, M_mask = params
    B, S, V = x.shape
    H = W_hh.shape[0]
    Q = T_idx.shape[0]

    # Layout plumbing in the wrapper (not compute): present the kernel with a
    # time-major (S*B, V) slab so all per-step reads are contiguous leading-axis
    # slices and all batched matmuls stay 2D inside the kernel.
    x_tm = jnp.transpose(x.astype(jnp.float32), (1, 0, 2)).reshape(S * B, V)

    def full(shape):
        return pl.BlockSpec(shape, lambda i, _n=len(shape): (0,) * _n)

    # NOTE(v7x): if B ever scales, add a leading grid axis over B marked
    # "parallel" so the two TensorCores split the batch; at B=4 the per-step
    # grid overhead (~0.35 us) would dominate, so keep grid=(1,).
    pred_tm, hidden, dfa_state = pl.pallas_call(
        rnn_dfa_kernel,
        out_shape=(jax.ShapeDtypeStruct((S * B, V), jnp.float32),
                   jax.ShapeDtypeStruct((B, H), jnp.float32),
                   jax.ShapeDtypeStruct((B, 1), jnp.int32)),
        grid=(1,),
        in_specs=[full((S * B, V)), full((V, H)), full((H, H)), full((1, H)),
                  full((H, V)), full((1, V)), full((Q, V)), full((Q, V))],
        out_specs=(full((S * B, V)), full((B, H)), full((B, 1))),
        compiler_params=pltpu.CompilerParams(
            dimension_semantics=("arbitrary",)),
    )(x_tm, W_ih, W_hh, b_h, W_out, b_out, T_idx, M_mask)

    # Back to the module's (B, S, V) layout (wrapper-side layout plumbing).
    pred = jnp.transpose(pred_tm.reshape(S, B, V), (1, 0, 2))
    return pred, (hidden, dfa_state[:, 0])


def reference_forward(x, params):
    W_ih, W_hh, b_h, W_out, b_out, T_idx, M_mask = params
    B, S, V = x.shape
    H = W_hh.shape[0]
    h = jnp.zeros((B, H), jnp.float32)
    state = jnp.zeros((B,), jnp.int32)
    preds = []
    Ti = T_idx.astype(jnp.int32)
    for t in range(S):
        x_t = x[:, t, :]
        idx = jnp.argmax(x_t, axis=-1)
        state = Ti[state, idx]
        mask = M_mask[state]
        h = jnp.tanh(x_t @ W_ih + h @ W_hh + b_h)
        p = jax.nn.softmax(h @ W_out + b_out, axis=-1)
        preds.append(p * mask)
    return jnp.stack(preds, axis=1), (h, state)


if __name__ == "__main__":
    B, S, V, H, Q = 4, 8, 3, 32, 5   # batch, seq, symbols(c0,c1,end), hidden, DFA states

    key = jax.random.PRNGKey(0)
    k = jax.random.split(key, 8)
    W_ih = 0.1 * jax.random.normal(k[0], (V, H), jnp.float32)
    W_hh = 0.1 * jax.random.normal(k[1], (H, H), jnp.float32)
    b_h = 0.1 * jax.random.normal(k[2], (1, H), jnp.float32)
    W_out = 0.1 * jax.random.normal(k[3], (H, V), jnp.float32)
    b_out = 0.1 * jax.random.normal(k[4], (1, V), jnp.float32)
    # Deterministic synthetic DFA tables (stand-in for DFA(ltl_formula,...).return_deep_dfa_constraint()).
    # TODO(synk): actual DFA tables come from an LTL->DFA compiler; here they are synthesized.
    T_idx = jax.random.randint(k[5], (Q, V), 0, Q).astype(jnp.float32)
    M_mask = jax.random.bernoulli(k[6], 0.7, (Q, V)).astype(jnp.float32)
    params = (W_ih, W_hh, b_h, W_out, b_out, T_idx, M_mask)

    # one-hot symbol sequences, matching the argmax(x, -1) convention of the module
    sym = jax.random.randint(k[7], (B, S), 0, V)
    x = jax.nn.one_hot(sym, V, dtype=jnp.float32)

    pred, (hidden, dfa_state) = jax.jit(rnn_with_constraints_forward)(x, params)
    jax.block_until_ready((pred, hidden, dfa_state))

    pred_ref, (hidden_ref, state_ref) = reference_forward(x, params)
    assert pred.shape == (B, S, V) and hidden.shape == (B, H) and dfa_state.shape == (B,)
    assert jnp.allclose(pred, pred_ref, atol=1e-3)
    assert jnp.allclose(hidden, hidden_ref, atol=1e-4)
    assert jnp.array_equal(dfa_state, state_ref)

    print("KERNEL_OK")
</pallas_src>

<mosaic_0001>
module attributes {stable_mosaic.version = 11 : i64} {
  func.func @rnn_dfa_kernel(%arg0: i32, %arg1: memref<32x3xf32, #tpu.memory_space<vmem>>, %arg2: memref<3x32xf32, #tpu.memory_space<vmem>>, %arg3: memref<32x32xf32, #tpu.memory_space<vmem>>, %arg4: memref<1x32xf32, #tpu.memory_space<vmem>>, %arg5: memref<32x3xf32, #tpu.memory_space<vmem>>, %arg6: memref<1x3xf32, #tpu.memory_space<vmem>>, %arg7: memref<5x3xf32, #tpu.memory_space<vmem>>, %arg8: memref<5x3xf32, #tpu.memory_space<vmem>>, %arg9: memref<32x3xf32, #tpu.memory_space<vmem>>, %arg10: memref<4x32xf32, #tpu.memory_space<vmem>>, %arg11: memref<4x1xi32, #tpu.memory_space<vmem>>) attributes {dimension_semantics = [#tpu.dimension_semantics<arbitrary>], iteration_bounds = array<i64: 1>, scalar_prefetch = 0 : i64, scratch_operands = 0 : i64, tpu.core_type = #tpu.core_type<tc>, window_params = [{pipeline_mode = #tpu.pipeline_mode<synchronous>, transform_indices = @transform_0, window_bounds = array<i64: 32, 3>}, {pipeline_mode = #tpu.pipeline_mode<synchronous>, transform_indices = @transform_1, window_bounds = array<i64: 3, 32>}, {pipeline_mode = #tpu.pipeline_mode<synchronous>, transform_indices = @transform_2, window_bounds = array<i64: 32, 32>}, {pipeline_mode = #tpu.pipeline_mode<synchronous>, transform_indices = @transform_3, window_bounds = array<i64: 1, 32>}, {pipeline_mode = #tpu.pipeline_mode<synchronous>, transform_indices = @transform_4, window_bounds = array<i64: 32, 3>}, {pipeline_mode = #tpu.pipeline_mode<synchronous>, transform_indices = @transform_5, window_bounds = array<i64: 1, 3>}, {pipeline_mode = #tpu.pipeline_mode<synchronous>, transform_indices = @transform_6, window_bounds = array<i64: 5, 3>}, {pipeline_mode = #tpu.pipeline_mode<synchronous>, transform_indices = @transform_7, window_bounds = array<i64: 5, 3>}, {pipeline_mode = #tpu.pipeline_mode<synchronous>, transform_indices = @transform_8, window_bounds = array<i64: 32, 3>}, {pipeline_mode = #tpu.pipeline_mode<synchronous>, transform_indices = @transform_9, window_bounds = array<i64: 4, 32>}, {pipeline_mode = #tpu.pipeline_mode<synchronous>, transform_indices = @transform_10, window_bounds = array<i64: 4, 1>}]} {
    %c0 = arith.constant 0 : index
    %c0_0 = arith.constant 0 : index
    %0 = vector.load %arg1[%c0, %c0_0] : memref<32x3xf32, #tpu.memory_space<vmem>>, vector<32x3xf32>
    %c0_1 = arith.constant 0 : index
    %c0_2 = arith.constant 0 : index
    %1 = vector.load %arg2[%c0_1, %c0_2] : memref<3x32xf32, #tpu.memory_space<vmem>>, vector<3x32xf32>
    %c0_3 = arith.constant 0 : index
    %c0_4 = arith.constant 0 : index
    %2 = vector.load %arg3[%c0_3, %c0_4] : memref<32x32xf32, #tpu.memory_space<vmem>>, vector<32x32xf32>
    %c0_5 = arith.constant 0 : index
    %c0_6 = arith.constant 0 : index
    %3 = vector.load %arg4[%c0_5, %c0_6] : memref<1x32xf32, #tpu.memory_space<vmem>>, vector<1x32xf32>
    %c0_7 = arith.constant 0 : index
    %c0_8 = arith.constant 0 : index
    %4 = vector.load %arg5[%c0_7, %c0_8] : memref<32x3xf32, #tpu.memory_space<vmem>>, vector<32x3xf32>
    %c0_9 = arith.constant 0 : index
    %c0_10 = arith.constant 0 : index
    %5 = vector.load %arg6[%c0_9, %c0_10] : memref<1x3xf32, #tpu.memory_space<vmem>>, vector<1x3xf32>
    %c0_11 = arith.constant 0 : index
    %c0_12 = arith.constant 0 : index
    %6 = vector.load %arg7[%c0_11, %c0_12] : memref<5x3xf32, #tpu.memory_space<vmem>>, vector<5x3xf32>
    %c0_13 = arith.constant 0 : index
    %c0_14 = arith.constant 0 : index
    %7 = vector.load %arg8[%c0_13, %c0_14] : memref<5x3xf32, #tpu.memory_space<vmem>>, vector<5x3xf32>
    %cst = arith.constant dense<0.000000e+00> : vector<32x32xf32>
    %8 = tpu.matmul %0, %1, %cst {dimension_numbers = #tpu.dot_dimension_numbers<[1], [0], [0], [1], [0, 0, 1, 1], [], []>} : vector<32x3xf32>, vector<3x32xf32>, vector<32x32xf32> -> vector<32x32xf32>
    %9 = vector.broadcast %3 : vector<1x32xf32> to vector<32x32xf32>
    %10 = arith.addf %8, %9 : vector<32x32xf32>
    %11 = tpu.iota {dimensions = array<i32: 1>} : vector<32x3xi32>
    %12 = arith.sitofp %11 : vector<32x3xi32> to vector<32x3xf32>
    %cst_15 = arith.constant dense<0xFF800000> : vector<32xf32>
    %13 = vector.multi_reduction <maximumf>, %0, %cst_15 [1] : vector<32x3xf32> to vector<32xf32>
    %14 = vector.shape_cast %13 : vector<32xf32> to vector<32x1xf32>
    %15 = vector.broadcast %14 : vector<32x1xf32> to vector<32x3xf32>
    %16 = arith.cmpf oeq, %0, %15 : vector<32x3xf32>
    %cst_16 = arith.constant 3.000000e+00 : f32
    %17 = vector.broadcast %cst_16 : f32 to vector<32x3xf32>
    %18 = arith.select %16, %12, %17 : vector<32x3xi1>, vector<32x3xf32>
    %cst_17 = arith.constant dense<0x7F800000> : vector<32xf32>
    %19 = vector.multi_reduction <minimumf>, %18, %cst_17 [1] : vector<32x3xf32> to vector<32xf32>
    %20 = vector.shape_cast %19 : vector<32xf32> to vector<32x1xf32>
    %21 = vector.broadcast %20 : vector<32x1xf32> to vector<32x3xf32>
    %22 = arith.cmpf oeq, %12, %21 : vector<32x3xf32>
    %23 = arith.extui %22 : vector<32x3xi1> to vector<32x3xi32>
    %24 = arith.sitofp %23 : vector<32x3xi32> to vector<32x3xf32>
    %cst_18 = arith.constant dense<0.000000e+00> : vector<32x5xf32>
    %25 = tpu.matmul %24, %6, %cst_18 {dimension_numbers = #tpu.dot_dimension_numbers<[1], [1], [0], [0], [0, 0, 1, 0], [], []>} : vector<32x3xf32>, vector<5x3xf32>, vector<32x5xf32> -> vector<32x5xf32>
    %26 = tpu.iota {dimensions = array<i32: 1>} : vector<4x5xi32>
    %27 = arith.sitofp %26 : vector<4x5xi32> to vector<4x5xf32>
    %cst_19 = arith.constant 0.000000e+00 : f32
    %28 = vector.broadcast %cst_19 : f32 to vector<4x5xf32>
    %29 = arith.cmpf oeq, %27, %28 : vector<4x5xf32>
    %30 = arith.extui %29 : vector<4x5xi1> to vector<4x5xi32>
    %31 = arith.sitofp %30 : vector<4x5xi32> to vector<4x5xf32>
    %32 = vector.extract_strided_slice %25 {offsets = [0, 0], sizes = [4, 5], strides = [1, 1]} : vector<32x5xf32> to vector<4x5xf32>
    %33 = arith.mulf %31, %32 : vector<4x5xf32>
    %cst_20 = arith.constant dense<0.000000e+00> : vector<4xf32>
    %34 = vector.multi_reduction <add>, %33, %cst_20 [1] : vector<4x5xf32> to vector<4xf32>
    %35 = vector.shape_cast %34 : vector<4xf32> to vector<4x1xf32>
    %36 = vector.broadcast %35 : vector<4x1xf32> to vector<4x5xf32>
    %37 = arith.cmpf oeq, %27, %36 : vector<4x5xf32>
    %38 = arith.extui %37 : vector<4x5xi1> to vector<4x5xi32>
    %39 = arith.sitofp %38 : vector<4x5xi32> to vector<4x5xf32>
    %40 = vector.extract_strided_slice %25 {offsets = [4, 0], sizes = [4, 5], strides = [1, 1]} : vector<32x5xf32> to vector<4x5xf32>
    %41 = arith.mulf %39, %40 : vector<4x5xf32>
    %cst_21 = arith.constant dense<0.000000e+00> : vector<4xf32>
    %42 = vector.multi_reduction <add>, %41, %cst_21 [1] : vector<4x5xf32> to vector<4xf32>
    %43 = vector.shape_cast %42 : vector<4xf32> to vector<4x1xf32>
    %44 = vector.broadcast %43 : vector<4x1xf32> to vector<4x5xf32>
    %45 = arith.cmpf oeq, %27, %44 : vector<4x5xf32>
    %46 = arith.extui %45 : vector<4x5xi1> to vector<4x5xi32>
    %47 = arith.sitofp %46 : vector<4x5xi32> to vector<4x5xf32>
    %48 = vector.extract_strided_slice %25 {offsets = [8, 0], sizes = [4, 5], strides = [1, 1]} : vector<32x5xf32> to vector<4x5xf32>
    %49 = arith.mulf %47, %48 : vector<4x5xf32>
    %cst_22 = arith.constant dense<0.000000e+00> : vector<4xf32>
    %50 = vector.multi_reduction <add>, %49, %cst_22 [1] : vector<4x5xf32> to vector<4xf32>
    %51 = vector.shape_cast %50 : vector<4xf32> to vector<4x1xf32>
    %52 = vector.broadcast %51 : vector<4x1xf32> to vector<4x5xf32>
    %53 = arith.cmpf oeq, %27, %52 : vector<4x5xf32>
    %54 = arith.extui %53 : vector<4x5xi1> to vector<4x5xi32>
    %55 = arith.sitofp %54 : vector<4x5xi32> to vector<4x5xf32>
    %56 = vector.extract_strided_slice %25 {offsets = [12, 0], sizes = [4, 5], strides = [1, 1]} : vector<32x5xf32> to vector<4x5xf32>
    %57 = arith.mulf %55, %56 : vector<4x5xf32>
    %cst_23 = arith.constant dense<0.000000e+00> : vector<4xf32>
    %58 = vector.multi_reduction <add>, %57, %cst_23 [1] : vector<4x5xf32> to vector<4xf32>
    %59 = vector.shape_cast %58 : vector<4xf32> to vector<4x1xf32>
    %60 = vector.broadcast %59 : vector<4x1xf32> to vector<4x5xf32>
    %61 = arith.cmpf oeq, %27, %60 : vector<4x5xf32>
    %62 = arith.extui %61 : vector<4x5xi1> to vector<4x5xi32>
    %63 = arith.sitofp %62 : vector<4x5xi32> to vector<4x5xf32>
    %64 = vector.extract_strided_slice %25 {offsets = [16, 0], sizes = [4, 5], strides = [1, 1]} : vector<32x5xf32> to vector<4x5xf32>
    %65 = arith.mulf %63, %64 : vector<4x5xf32>
    %cst_24 = arith.constant dense<0.000000e+00> : vector<4xf32>
    %66 = vector.multi_reduction <add>, %65, %cst_24 [1] : vector<4x5xf32> to vector<4xf32>
    %67 = vector.shape_cast %66 : vector<4xf32> to vector<4x1xf32>
    %68 = vector.broadcast %67 : vector<4x1xf32> to vector<4x5xf32>
    %69 = arith.cmpf oeq, %27, %68 : vector<4x5xf32>
    %70 = arith.extui %69 : vector<4x5xi1> to vector<4x5xi32>
    %71 = arith.sitofp %70 : vector<4x5xi32> to vector<4x5xf32>
    %72 = vector.extract_strided_slice %25 {offsets = [20, 0], sizes = [4, 5], strides = [1, 1]} : vector<32x5xf32> to vector<4x5xf32>
    %73 = arith.mulf %71, %72 : vector<4x5xf32>
    %cst_25 = arith.constant dense<0.000000e+00> : vector<4xf32>
    %74 = vector.multi_reduction <add>, %73, %cst_25 [1] : vector<4x5xf32> to vector<4xf32>
    %75 = vector.shape_cast %74 : vector<4xf32> to vector<4x1xf32>
    %76 = vector.broadcast %75 : vector<4x1xf32> to vector<4x5xf32>
    %77 = arith.cmpf oeq, %27, %76 : vector<4x5xf32>
    %78 = arith.extui %77 : vector<4x5xi1> to vector<4x5xi32>
    %79 = arith.sitofp %78 : vector<4x5xi32> to vector<4x5xf32>
    %80 = vector.extract_strided_slice %25 {offsets = [24, 0], sizes = [4, 5], strides = [1, 1]} : vector<32x5xf32> to vector<4x5xf32>
    %81 = arith.mulf %79, %80 : vector<4x5xf32>
    %cst_26 = arith.constant dense<0.000000e+00> : vector<4xf32>
    %82 = vector.multi_reduction <add>, %81, %cst_26 [1] : vector<4x5xf32> to vector<4xf32>
    %83 = vector.shape_cast %82 : vector<4xf32> to vector<4x1xf32>
    %84 = vector.broadcast %83 : vector<4x1xf32> to vector<4x5xf32>
    %85 = arith.cmpf oeq, %27, %84 : vector<4x5xf32>
    %86 = arith.extui %85 : vector<4x5xi1> to vector<4x5xi32>
    %87 = arith.sitofp %86 : vector<4x5xi32> to vector<4x5xf32>
    %88 = vector.extract_strided_slice %25 {offsets = [28, 0], sizes = [4, 5], strides = [1, 1]} : vector<32x5xf32> to vector<4x5xf32>
    %89 = arith.mulf %87, %88 : vector<4x5xf32>
    %cst_27 = arith.constant dense<0.000000e+00> : vector<4xf32>
    %90 = vector.multi_reduction <add>, %89, %cst_27 [1] : vector<4x5xf32> to vector<4xf32>
    %91 = vector.shape_cast %90 : vector<4xf32> to vector<4x1xf32>
    %92 = vector.broadcast %91 : vector<4x1xf32> to vector<4x5xf32>
    %93 = arith.cmpf oeq, %27, %92 : vector<4x5xf32>
    %94 = arith.extui %93 : vector<4x5xi1> to vector<4x5xi32>
    %95 = arith.sitofp %94 : vector<4x5xi32> to vector<4x5xf32>
    %96 = arith.mulf %95, %27 : vector<4x5xf32>
    %cst_28 = arith.constant dense<0.000000e+00> : vector<4xf32>
    %97 = vector.multi_reduction <add>, %96, %cst_28 [1] : vector<4x5xf32> to vector<4xf32>
    %98 = vector.shape_cast %97 : vector<4xf32> to vector<4x1xf32>
    %99 = arith.fptosi %98 : vector<4x1xf32> to vector<4x1xi32>
    %c0_29 = arith.constant 0 : index
    %c0_30 = arith.constant 0 : index
    %100 = vector.load %arg11[%c0_29, %c0_30] : memref<4x1xi32, #tpu.memory_space<vmem>>, vector<4x1xi32>
    tpu.vector_store %arg11[%c0_29, %c0_30], %99 {strides = array<i32>} : memref<4x1xi32, #tpu.memory_space<vmem>>, vector<4x1xi32>,
    %101 = tpu.concatenate %39, %47, %55, %63, %71, %79, %87, %95 in 0 : vector<4x5xf32>, vector<4x5xf32>, vector<4x5xf32>, vector<4x5xf32>, vector<4x5xf32>, vector<4x5xf32>, vector<4x5xf32>, vector<4x5xf32> -> vector<32x5xf32>
    %cst_31 = arith.constant dense<0.000000e+00> : vector<32x3xf32>
    %102 = tpu.matmul %101, %7, %cst_31 {dimension_numbers = #tpu.dot_dimension_numbers<[1], [0], [0], [1], [0, 0, 1, 1], [], []>} : vector<32x5xf32>, vector<5x3xf32>, vector<32x3xf32> -> vector<32x3xf32>
    %cst_32 = arith.constant 0.000000e+00 : f32
    %103 = vector.broadcast %cst_32 : f32 to vector<4x32xf32>
    %104 = vector.extract_strided_slice %10 {offsets = [0, 0], sizes = [4, 32], strides = [1, 1]} : vector<32x32xf32> to vector<4x32xf32>
    %cst_33 = arith.constant dense<0.000000e+00> : vector<4x32xf32>
    %105 = tpu.matmul %103, %2, %cst_33 {dimension_numbers = #tpu.dot_dimension_numbers<[1], [0], [0], [1], [0, 0, 1, 1], [], []>} : vector<4x32xf32>, vector<32x32xf32>, vector<4x32xf32> -> vector<4x32xf32>
    %106 = arith.addf %104, %105 : vector<4x32xf32>
    %107 = math.tanh %106 : vector<4x32xf32>
    %108 = vector.extract_strided_slice %10 {offsets = [4, 0], sizes = [4, 32], strides = [1, 1]} : vector<32x32xf32> to vector<4x32xf32>
    %cst_34 = arith.constant dense<0.000000e+00> : vector<4x32xf32>
    %109 = tpu.matmul %107, %2, %cst_34 {dimension_numbers = #tpu.dot_dimension_numbers<[1], [0], [0], [1], [0, 0, 1, 1], [], []>} : vector<4x32xf32>, vector<32x32xf32>, vector<4x32xf32> -> vector<4x32xf32>
    %110 = arith.addf %108, %109 : vector<4x32xf32>
    %111 = math.tanh %110 : vector<4x32xf32>
    %112 = vector.extract_strided_slice %10 {offsets = [8, 0], sizes = [4, 32], strides = [1, 1]} : vector<32x32xf32> to vector<4x32xf32>
    %cst_35 = arith.constant dense<0.000000e+00> : vector<4x32xf32>
    %113 = tpu.matmul %111, %2, %cst_35 {dimension_numbers = #tpu.dot_dimension_numbers<[1], [0], [0], [1], [0, 0, 1, 1], [], []>} : vector<4x32xf32>, vector<32x32xf32>, vector<4x32xf32> -> vector<4x32xf32>
    %114 = arith.addf %112, %113 : vector<4x32xf32>
    %115 = math.tanh %114 : vector<4x32xf32>
    %116 = vector.extract_strided_slice %10 {offsets = [12, 0], sizes = [4, 32], strides = [1, 1]} : vector<32x32xf32> to vector<4x32xf32>
    %cst_36 = arith.constant dense<0.000000e+00> : vector<4x32xf32>
    %117 = tpu.matmul %115, %2, %cst_36 {dimension_numbers = #tpu.dot_dimension_numbers<[1], [0], [0], [1], [0, 0, 1, 1], [], []>} : vector<4x32xf32>, vector<32x32xf32>, vector<4x32xf32> -> vector<4x32xf32>
    %118 = arith.addf %116, %117 : vector<4x32xf32>
    %119 = math.tanh %118 : vector<4x32xf32>
    %120 = vector.extract_strided_slice %10 {offsets = [16, 0], sizes = [4, 32], strides = [1, 1]} : vector<32x32xf32> to vector<4x32xf32>
    %cst_37 = arith.constant dense<0.000000e+00> : vector<4x32xf32>
    %121 = tpu.matmul %119, %2, %cst_37 {dimension_numbers = #tpu.dot_dimension_numbers<[1], [0], [0], [1], [0, 0, 1, 1], [], []>} : vector<4x32xf32>, vector<32x32xf32>, vector<4x32xf32> -> vector<4x32xf32>
    %122 = arith.addf %120, %121 : vector<4x32xf32>
    %123 = math.tanh %122 : vector<4x32xf32>
    %124 = vector.extract_strided_slice %10 {offsets = [20, 0], sizes = [4, 32], strides = [1, 1]} : vector<32x32xf32> to vector<4x32xf32>
    %cst_38 = arith.constant dense<0.000000e+00> : vector<4x32xf32>
    %125 = tpu.matmul %123, %2, %cst_38 {dimension_numbers = #tpu.dot_dimension_numbers<[1], [0], [0], [1], [0, 0, 1, 1], [], []>} : vector<4x32xf32>, vector<32x32xf32>, vector<4x32xf32> -> vector<4x32xf32>
    %126 = arith.addf %124, %125 : vector<4x32xf32>
    %127 = math.tanh %126 : vector<4x32xf32>
    %128 = vector.extract_strided_slice %10 {offsets = [24, 0], sizes = [4, 32], strides = [1, 1]} : vector<32x32xf32> to vector<4x32xf32>
    %cst_39 = arith.constant dense<0.000000e+00> : vector<4x32xf32>
    %129 = tpu.matmul %127, %2, %cst_39 {dimension_numbers = #tpu.dot_dimension_numbers<[1], [0], [0], [1], [0, 0, 1, 1], [], []>} : vector<4x32xf32>, vector<32x32xf32>, vector<4x32xf32> -> vector<4x32xf32>
    %130 = arith.addf %128, %129 : vector<4x32xf32>
    %131 = math.tanh %130 : vector<4x32xf32>
    %132 = vector.extract_strided_slice %10 {offsets = [28, 0], sizes = [4, 32], strides = [1, 1]} : vector<32x32xf32> to vector<4x32xf32>
    %cst_40 = arith.constant dense<0.000000e+00> : vector<4x32xf32>
    %133 = tpu.matmul %131, %2, %cst_40 {dimension_numbers = #tpu.dot_dimension_numbers<[1], [0], [0], [1], [0, 0, 1, 1], [], []>} : vector<4x32xf32>, vector<32x32xf32>, vector<4x32xf32> -> vector<4x32xf32>
    %134 = arith.addf %132, %133 : vector<4x32xf32>
    %135 = math.tanh %134 : vector<4x32xf32>
    %c0_41 = arith.constant 0 : index
    %c0_42 = arith.constant 0 : index
    %136 = vector.load %arg10[%c0_41, %c0_42] : memref<4x32xf32, #tpu.memory_space<vmem>>, vector<4x32xf32>
    tpu.vector_store %arg10[%c0_41, %c0_42], %135 {strides = array<i32>} : memref<4x32xf32, #tpu.memory_space<vmem>>, vector<4x32xf32>,
    %137 = tpu.concatenate %107, %111, %115, %119, %123, %127, %131, %135 in 0 : vector<4x32xf32>, vector<4x32xf32>, vector<4x32xf32>, vector<4x32xf32>, vector<4x32xf32>, vector<4x32xf32>, vector<4x32xf32>, vector<4x32xf32> -> vector<32x32xf32>
    %cst_43 = arith.constant dense<0.000000e+00> : vector<32x3xf32>
    %138 = tpu.matmul %137, %4, %cst_43 {dimension_numbers = #tpu.dot_dimension_numbers<[1], [0], [0], [1], [0, 0, 1, 1], [], []>} : vector<32x32xf32>, vector<32x3xf32>, vector<32x3xf32> -> vector<32x3xf32>
    %139 = vector.broadcast %5 : vector<1x3xf32> to vector<32x3xf32>
    %140 = arith.addf %138, %139 : vector<32x3xf32>
    %cst_44 = arith.constant dense<0xFF800000> : vector<32xf32>
    %141 = vector.multi_reduction <maximumf>, %140, %cst_44 [1] : vector<32x3xf32> to vector<32xf32>
    %142 = vector.shape_cast %141 : vector<32xf32> to vector<32x1xf32>
    %143 = vector.broadcast %142 : vector<32x1xf32> to vector<32x3xf32>
    %144 = arith.subf %140, %143 : vector<32x3xf32>
    %145 = math.exp %144 : vector<32x3xf32>
    %cst_45 = arith.constant dense<0.000000e+00> : vector<32xf32>
    %146 = vector.multi_reduction <add>, %145, %cst_45 [1] : vector<32x3xf32> to vector<32xf32>
    %147 = vector.shape_cast %146 : vector<32xf32> to vector<32x1xf32>
    %148 = tpu.reciprocal %147 {approx = true} : vector<32x1xf32> -> vector<32x1xf32>
    %149 = arith.mulf %147, %148 : vector<32x1xf32>
    %cst_46 = arith.constant 2.000000e+00 : f32
    %150 = vector.broadcast %cst_46 : f32 to vector<32x1xf32>
    %151 = arith.subf %150, %149 : vector<32x1xf32>
    %152 = arith.mulf %148, %151 : vector<32x1xf32>
    %153 = vector.broadcast %152 : vector<32x1xf32> to vector<32x3xf32>
    %154 = arith.mulf %145, %153 : vector<32x3xf32>
    %155 = arith.mulf %154, %102 : vector<32x3xf32>
    %c0_47 = arith.constant 0 : index
    %c0_48 = arith.constant 0 : index
    %156 = vector.load %arg9[%c0_47, %c0_48] : memref<32x3xf32, #tpu.memory_space<vmem>>, vector<32x3xf32>
    tpu.vector_store %arg9[%c0_47, %c0_48], %155 {strides = array<i32>} : memref<32x3xf32, #tpu.memory_space<vmem>>, vector<32x3xf32>,
    return
  }
  func.func @transform_0(%arg0: i32) -> (i32, i32) {
    %c0_i32 = arith.constant 0 : i32
    %c0_i32_0 = arith.constant 0 : i32
    %c0_i32_1 = arith.constant 0 : i32
    return %c0_i32, %c0_i32_0 : i32, i32
  }
  func.func @transform_1(%arg0: i32) -> (i32, i32) {
    %c0_i32 = arith.constant 0 : i32
    %c0_i32_0 = arith.constant 0 : i32
    %c0_i32_1 = arith.constant 0 : i32
    return %c0_i32, %c0_i32_0 : i32, i32
  }
  func.func @transform_2(%arg0: i32) -> (i32, i32) {
    %c0_i32 = arith.constant 0 : i32
    %c0_i32_0 = arith.constant 0 : i32
    %c0_i32_1 = arith.constant 0 : i32
    return %c0_i32, %c0_i32_0 : i32, i32
  }
  func.func @transform_3(%arg0: i32) -> (i32, i32) {
    %c0_i32 = arith.constant 0 : i32
    %c0_i32_0 = arith.constant 0 : i32
    %c0_i32_1 = arith.constant 0 : i32
    return %c0_i32, %c0_i32_0 : i32, i32
  }
  func.func @transform_4(%arg0: i32) -> (i32, i32) {
    %c0_i32 = arith.constant 0 : i32
    %c0_i32_0 = arith.constant 0 : i32
    %c0_i32_1 = arith.constant 0 : i32
    return %c0_i32, %c0_i32_0 : i32, i32
  }
  func.func @transform_5(%arg0: i32) -> (i32, i32) {
    %c0_i32 = arith.constant 0 : i32
    %c0_i32_0 = arith.constant 0 : i32
    %c0_i32_1 = arith.constant 0 : i32
    return %c0_i32, %c0_i32_0 : i32, i32
  }
  func.func @transform_6(%arg0: i32) -> (i32, i32) {
    %c0_i32 = arith.constant 0 : i32
    %c0_i32_0 = arith.constant 0 : i32
    %c0_i32_1 = arith.constant 0 : i32
    return %c0_i32, %c0_i32_0 : i32, i32
  }
  func.func @transform_7(%arg0: i32) -> (i32, i32) {
    %c0_i32 = arith.constant 0 : i32
    %c0_i32_0 = arith.constant 0 : i32
    %c0_i32_1 = arith.constant 0 : i32
    return %c0_i32, %c0_i32_0 : i32, i32
  }
  func.func @transform_8(%arg0: i32) -> (i32, i32) {
    %c0_i32 = arith.constant 0 : i32
    %c0_i32_0 = arith.constant 0 : i32
    %c0_i32_1 = arith.constant 0 : i32
    return %c0_i32, %c0_i32_0 : i32, i32
  }
  func.func @transform_9(%arg0: i32) -> (i32, i32) {
    %c0_i32 = arith.constant 0 : i32
    %c0_i32_0 = arith.constant 0 : i32
    %c0_i32_1 = arith.constant 0 : i32
    return %c0_i32, %c0_i32_0 : i32, i32
  }
  func.func @transform_10(%arg0: i32) -> (i32, i32) {
    %c0_i32 = arith.constant 0 : i32
    %c0_i32_0 = arith.constant 0 : i32
    %c0_i32_1 = arith.constant 0 : i32
    return %c0_i32, %c0_i32_0 : i32, i32
  }
}

</mosaic_0001>

<llo_original>
// kernel: rnn_with_constraints_forward.1
$region0: #{rnn_with_constraints_forward.1}
  #allocation0 [shape = 'u32[]', space=smem, size = 0x4, offset = 0x4, fixed_abs, tag = 'smem constant byte address 0x4 - core index']
  #allocation1 [shape = 'u32[144,128]{1,0:T(1,128)}', space=vmem, size = 0x12000, scoped, tag = 'internal scratch']
  %s0 = inlined_call_operand.vmem [shape: f32[32,3], index: 0, kind: input, shape index: {}]
  %s1 = inlined_call_operand.vmem [shape: f32[3,32], index: 1, kind: input, shape index: {}]
  %s2 = inlined_call_operand.vmem [shape: f32[32,32], index: 2, kind: input, shape index: {}]
  %s3 = inlined_call_operand.vmem [shape: f32[1,32], index: 3, kind: input, shape index: {}]
  %s4 = inlined_call_operand.vmem [shape: f32[32,3], index: 4, kind: input, shape index: {}]
  %s5 = inlined_call_operand.vmem [shape: f32[1,3], index: 5, kind: input, shape index: {}]
  %s6 = inlined_call_operand.vmem [shape: f32[5,3], index: 6, kind: input, shape index: {}]
  %s7 = inlined_call_operand.vmem [shape: f32[5,3], index: 7, kind: input, shape index: {}]
  %s8 = inlined_call_operand.vmem [shape: f32[32,3], index: 8, kind: output, shape index: {0}]
  %s9 = inlined_call_operand.hbm [shape: f32[4,32], index: 9, kind: output, shape index: {1}]
  %s10 = inlined_call_operand.vmem [shape: s32[4,1], index: 10, kind: output, shape index: {2}]
  %11 = xla_tuple %s8, %s9, %s10
  %s12 = sld [smem:[#allocation0]]
  $region58: #{rnn_with_constraints_forward.1} parent=0
    _
  %s14 = ssub.s32 1, %s12
  %s15 = scalar_select 0, %s14, %s12
  $region1: #{rnn_with_constraints_forward.1} parent=0
    #allocation2 [shape = 'u8[2048]{0}', space=vmem, size = 0x800, scoped, tag = 'output window, operand 1, single buffered']
    #allocation3 [shape = 's32[1]{0}', space=sflag, size = 0x4, scoped, tag = 'scoped memory for rnn_with_constraints_forward.1']
    %16 = vsyncpa [#allocation3], 0
    // Predicated region
    $region2: #{rnn_with_constraints_forward.1} parent=1 // pred_check
      _
    $region3: #{rnn_with_constraints_forward.1} parent=1 // pred_check_branch
      %18 = sbr.rel (0) target = $region5
    $region4: #{rnn_with_constraints_forward.1} parent=1 // pred_region
      _
    $region5: #{rnn_with_constraints_forward.1} parent=1 // pred_fallthru
      _
    // Predicated region
    $region6: #{rnn_with_constraints_forward.1} parent=1 // pred_check
      _
    $region7: #{rnn_with_constraints_forward.1} parent=1 // pred_check_branch
      %20 = sbr.rel (0) target = $region9
    $region8: #{rnn_with_constraints_forward.1} parent=1 // pred_region
      _
    $region9: #{rnn_with_constraints_forward.1} parent=1 // pred_fallthru
      _
    // Predicated region
    $region10: #{rnn_with_constraints_forward.1} parent=1 // pred_check
      _
    $region11: #{rnn_with_constraints_forward.1} parent=1 // pred_check_branch
      %22 = sbr.rel (0) target = $region13
    $region12: #{rnn_with_constraints_forward.1} parent=1 // pred_region
      _
    $region13: #{rnn_with_constraints_forward.1} parent=1 // pred_fallthru
      _
    // Predicated region
    $region14: #{rnn_with_constraints_forward.1} parent=1 // pred_check
      _
    $region15: #{rnn_with_constraints_forward.1} parent=1 // pred_check_branch
      %24 = sbr.rel (0) target = $region17
    $region16: #{rnn_with_constraints_forward.1} parent=1 // pred_region
      _
    $region17: #{rnn_with_constraints_forward.1} parent=1 // pred_fallthru
      _
    // Predicated region
    $region18: #{rnn_with_constraints_forward.1} parent=1 // pred_check
      _
    $region19: #{rnn_with_constraints_forward.1} parent=1 // pred_check_branch
      %26 = sbr.rel (0) target = $region21
    $region20: #{rnn_with_constraints_forward.1} parent=1 // pred_region
      _
    $region21: #{rnn_with_constraints_forward.1} parent=1 // pred_fallthru
      _
    // Predicated region
    $region22: #{rnn_with_constraints_forward.1} parent=1 // pred_check
      _
    $region23: #{rnn_with_constraints_forward.1} parent=1 // pred_check_branch
      %28 = sbr.rel (0) target = $region25
    $region24: #{rnn_with_constraints_forward.1} parent=1 // pred_region
      _
    $region25: #{rnn_with_constraints_forward.1} parent=1 // pred_fallthru
      _
    // Predicated region
    $region26: #{rnn_with_constraints_forward.1} parent=1 // pred_check
      _
    $region27: #{rnn_with_constraints_forward.1} parent=1 // pred_check_branch
      %30 = sbr.rel (0) target = $region29
    $region28: #{rnn_with_constraints_forward.1} parent=1 // pred_region
      _
    $region29: #{rnn_with_constraints_forward.1} parent=1 // pred_fallthru
      _
    // Predicated region
    $region30: #{rnn_with_constraints_forward.1} parent=1 // pred_check
      _
    $region31: #{rnn_with_constraints_forward.1} parent=1 // pred_check_branch
      %32 = sbr.rel (0) target = $region33
    $region32: #{rnn_with_constraints_forward.1} parent=1 // pred_region
      _
    $region33: #{rnn_with_constraints_forward.1} parent=1 // pred_fallthru
      _
    %v33 = vld [vmem:[%s0] sm:$0xff]
    %v34 = vld [vmem:[%s0 + $0x8] sm:$0xff]
    %v35 = vld [vmem:[%s0 + $0x10] sm:$0xff]
    %v36 = vld [vmem:[%s0 + $0x18] sm:$0xff]
    %v37 = vld [vmem:[%s1] sm:$0x7]
    %v38 = vld [vmem:[%s2] sm:$0xff]
    %v39 = vld [vmem:[%s2 + $0x8] sm:$0xff]
    %v40 = vld [vmem:[%s2 + $0x10] sm:$0xff]
    %v41 = vld [vmem:[%s2 + $0x18] sm:$0xff]
    %v42 = vld [vmem:[%s3] sm:$0x1]
    %v43 = vld [vmem:[%s4] sm:$0xff]
    %v44 = vld [vmem:[%s4 + $0x8] sm:$0xff]
    %v45 = vld [vmem:[%s4 + $0x10] sm:$0xff]
    %v46 = vld [vmem:[%s4 + $0x18] sm:$0xff]
    %v47 = vld [vmem:[%s5] sm:$0x1]
    %v48 = vld [vmem:[%s6] sm:$0x1f]
    %v49 = vld [vmem:[%s7] sm:$0x1f]
    %v51 = vlaneseq
    %v52 = vshrl.u32 %v51, 7
    %v53 = vsub.s32 0, %v52
    %v54 = vrot.slane %v42, %v53
    %vm56 = vcmask 23552
    %v58 = vsel %vm56, %v33, 0
    %v61 = vsel %vm56, %v34, 0
    %v64 = vsel %vm56, %v35, 0
    %v67 = vsel %vm56, %v36, 0
    %vm69 = vcmask 1042432
    %v71 = vsel %vm69, %v37, 0
    %73 = vmatprep.subr.mxu0 0.0
    %74 = vmatpush1.msra.mxu0 0.0
    %75 = vmatprep.subr.mxu0 0.0
    %76 = vmatpush1.msra.mxu0 0.0
    %77 = vmatprep.subr.mxu0 0.0
    %78 = vmatpush1.msra.mxu0 0.0
    %79 = vmatprep.subr.mxu0 0.0
    %80 = vmatpush1.msra.mxu0 0.0
    %81 = vmatprep.subr.mxu0 0.0
    %82 = vmatpush1.msra.mxu0 0.0
    %83 = vmatprep.subr.mxu0 0.0
    %84 = vmatpush1.msra.mxu0 0.0
    %85 = vmatprep.subr.mxu0 0.0
    %86 = vmatpush1.msra.mxu0 0.0
    %87 = vmatprep.subr.mxu0 0.0
    %88 = vmatpush1.msra.mxu0 0.0
    %89 = vmatprep.subr.mxu0 0.0
    %90 = vmatpush1.msra.mxu0 0.0
    %91 = vmatprep.subr.mxu0 0.0
    %92 = vmatpush1.msra.mxu0 0.0
    %93 = vmatprep.subr.mxu0 0.0
    %94 = vmatpush1.msra.mxu0 0.0
    %95 = vmatprep.subr.mxu0 0.0
    %96 = vmatpush1.msra.mxu0 0.0
    %97 = vmatprep.subr.mxu0 0.0
    %98 = vmatpush1.msra.mxu0 0.0
    %99 = vmatprep.subr.mxu0 0.0
    %100 = vmatpush1.msra.mxu0 0.0
    %101 = vmatprep.subr.mxu0 0.0
    %102 = vmatpush1.msra.mxu0 0.0
    %103 = vmatprep.subr.mxu0 0.0
    %104 = vmatpush1.msra.mxu0 %v71
    %105 = vmatprep.subr.mxu0 0.0
    %106 = vmatpush2.msra.mxu0 0.0
    %107 = vmatprep.subr.mxu0 0.0
    %108 = vmatpush2.msra.mxu0 0.0
    %109 = vmatprep.subr.mxu0 0.0
    %110 = vmatpush2.msra.mxu0 0.0
    %111 = vmatprep.subr.mxu0 0.0
    %112 = vmatpush2.msra.mxu0 0.0
    %113 = vmatprep.subr.mxu0 0.0
    %114 = vmatpush2.msra.mxu0 0.0
    %115 = vmatprep.subr.mxu0 0.0
    %116 = vmatpush2.msra.mxu0 0.0
    %117 = vmatprep.subr.mxu0 0.0
    %118 = vmatpush2.msra.mxu0 0.0
    %119 = vmatprep.subr.mxu0 0.0
    %120 = vmatpush2.msra.mxu0 0.0
    %121 = vmatprep.subr.mxu0 0.0
    %122 = vmatpush2.msra.mxu0 0.0
    %123 = vmatprep.subr.mxu0 0.0
    %124 = vmatpush2.msra.mxu0 0.0
    %125 = vmatprep.subr.mxu0 0.0
    %126 = vmatpush2.msra.mxu0 0.0
    %127 = vmatprep.subr.mxu0 0.0
    %128 = vmatpush2.msra.mxu0 0.0
    %129 = vmatprep.subr.mxu0 0.0
    %130 = vmatpush2.msra.mxu0 0.0
    %131 = vmatprep.subr.mxu0 0.0
    %132 = vmatpush2.msra.mxu0 0.0
    %133 = vmatprep.subr.mxu0 0.0
    %134 = vmatpush2.msra.mxu0 0.0
    %135 = vmatprep.subr.mxu0 0.0
    %136 = vmatpush2.msra.mxu0 0.0
    %137 = vmatprep.mubr.f32.mxu0 0.0
    %138 = vmatmul.mubr.f32.gmra.mxu0 %v58
    %v139 = vpop.f32.mrf.mxu0
    %v140 = vadd.f32 %v54, %v139
    %v141 = vpop.f32.mrf.mxu0
    %142 = vmatprep.mubr.f32.mxu0 0.0
    %143 = vmatmul.mubr.f32.gmra.mxu0 %v61
    %v144 = vpop.f32.mrf.mxu0
    %v145 = vadd.f32 %v54, %v144
    %v146 = vpop.f32.mrf.mxu0
    %147 = vmatprep.mubr.f32.mxu0 0.0
    %148 = vmatmul.mubr.f32.gmra.mxu0 %v64
    %v149 = vpop.f32.mrf.mxu0
    %v150 = vadd.f32 %v54, %v149
    %v151 = vpop.f32.mrf.mxu0
    %152 = vmatprep.mubr.f32.mxu0 0.0
    %153 = vmatmul.mubr.f32.gmra.mxu0 %v67
    %v154 = vpop.f32.mrf.mxu0
    %v155 = vadd.f32 %v54, %v154
    %v156 = vpop.f32.mrf.mxu0
    %157 = vdwg.mxu0
    %v158 = vlaneseq
    %v159 = vand.u32 %v158, 127
    %v160 = vcvt.s32.f32 %v159
    %v161 = vsel %vm56, %v33, -inf
    %162 = vmax.xlane.f32.xlu0 %v161
    %v163 = vpop.xlane.xlu0 %162
    %v164 = vsel %vm56, %v34, -inf
    %165 = vmax.xlane.f32.xlu0 %v164
    %v166 = vpop.xlane.xlu0 %165
    %v167 = vsel %vm56, %v35, -inf
    %168 = vmax.xlane.f32.xlu0 %v167
    %v169 = vpop.xlane.xlu0 %168
    %v170 = vsel %vm56, %v36, -inf
    %171 = vmax.xlane.f32.xlu0 %v170
    %v172 = vpop.xlane.xlu0 %171
    %vm173 = vcmp.eq.f32.partialorder %v33, %v163
    %vm174 = vcmp.eq.f32.partialorder %v34, %v166
    %vm175 = vcmp.eq.f32.partialorder %v35, %v169
    %vm176 = vcmp.eq.f32.partialorder %v36, %v172
    %v177 = vsel %vm173, %v160, 3.0
    %v178 = vsel %vm174, %v160, 3.0
    %v179 = vsel %vm175, %v160, 3.0
    %v180 = vsel %vm176, %v160, 3.0
    %v181 = vsel %vm56, %v177, inf
    %182 = vmin.xlane.f32.xlu0 %v181
    %v183 = vpop.xlane.xlu0 %182
    %v184 = vsel %vm56, %v178, inf
    %185 = vmin.xlane.f32.xlu0 %v184
    %v186 = vpop.xlane.xlu0 %185
    %v187 = vsel %vm56, %v179, inf
    %188 = vmin.xlane.f32.xlu0 %v187
    %v189 = vpop.xlane.xlu0 %188
    %v190 = vsel %vm56, %v180, inf
    %191 = vmin.xlane.f32.xlu0 %v190
    %v192 = vpop.xlane.xlu0 %191
    %vm193 = vcmp.eq.f32.partialorder %v160, %v183
    %vm194 = vcmp.eq.f32.partialorder %v160, %v186
    %vm195 = vcmp.eq.f32.partialorder %v160, %v189
    %vm196 = vcmp.eq.f32.partialorder %v160, %v192
    %v197 = vsel %vm193, 1, 0
    %v198 = vsel %vm194, 1, 0
    %v199 = vsel %vm195, 1, 0
    %v200 = vsel %vm196, 1, 0
    %v201 = vcvt.s32.f32 %v197
    %v202 = vcvt.s32.f32 %v198
    %v203 = vcvt.s32.f32 %v199
    %v204 = vcvt.s32.f32 %v200
    %v206 = vsel %vm56, %v201, 0
    %v209 = vsel %vm56, %v202, 0
    %v212 = vsel %vm56, %v203, 0
    %v215 = vsel %vm56, %v204, 0
    %v218 = vsel %vm56, %v48, 0
    %220 = vmatprep.subr.mxu0 0.0
    %221 = vmatpush1.xpose.msra.mxu0 0.0
    %222 = vmatprep.subr.mxu0 0.0
    %223 = vmatpush1.xpose.msra.mxu0 0.0
    %224 = vmatprep.subr.mxu0 0.0
    %225 = vmatpush1.xpose.msra.mxu0 0.0
    %226 = vmatprep.subr.mxu0 0.0
    %227 = vmatpush1.xpose.msra.mxu0 0.0
    %228 = vmatprep.subr.mxu0 0.0
    %229 = vmatpush1.xpose.msra.mxu0 0.0
    %230 = vmatprep.subr.mxu0 0.0
    %231 = vmatpush1.xpose.msra.mxu0 0.0
    %232 = vmatprep.subr.mxu0 0.0
    %233 = vmatpush1.xpose.msra.mxu0 0.0
    %234 = vmatprep.subr.mxu0 0.0
    %235 = vmatpush1.xpose.msra.mxu0 0.0
    %236 = vmatprep.subr.mxu0 0.0
    %237 = vmatpush1.xpose.msra.mxu0 0.0
    %238 = vmatprep.subr.mxu0 0.0
    %239 = vmatpush1.xpose.msra.mxu0 0.0
    %240 = vmatprep.subr.mxu0 0.0
    %241 = vmatpush1.xpose.msra.mxu0 0.0
    %242 = vmatprep.subr.mxu0 0.0
    %243 = vmatpush1.xpose.msra.mxu0 0.0
    %244 = vmatprep.subr.mxu0 0.0
    %245 = vmatpush1.xpose.msra.mxu0 0.0
    %246 = vmatprep.subr.mxu0 0.0
    %247 = vmatpush1.xpose.msra.mxu0 0.0
    %248 = vmatprep.subr.mxu0 0.0
    %249 = vmatpush1.xpose.msra.mxu0 0.0
    %250 = vmatprep.subr.mxu0 0.0
    %251 = vmatpush1.xpose.msra.mxu0 %v218
    %252 = vmatprep.subr.mxu0 0.0
    %253 = vmatpush2.xpose.msra.mxu0 0.0
    %254 = vmatprep.subr.mxu0 0.0
    %255 = vmatpush2.xpose.msra.mxu0 0.0
    %256 = vmatprep.subr.mxu0 0.0
    %257 = vmatpush2.xpose.msra.mxu0 0.0
    %258 = vmatprep.subr.mxu0 0.0
    %259 = vmatpush2.xpose.msra.mxu0 0.0
    %260 = vmatprep.subr.mxu0 0.0
    %261 = vmatpush2.xpose.msra.mxu0 0.0
    %262 = vmatprep.subr.mxu0 0.0
    %263 = vmatpush2.xpose.msra.mxu0 0.0
    %264 = vmatprep.subr.mxu0 0.0
    %265 = vmatpush2.xpose.msra.mxu0 0.0
    %266 = vmatprep.subr.mxu0 0.0
    %267 = vmatpush2.xpose.msra.mxu0 0.0
    %268 = vmatprep.subr.mxu0 0.0
    %269 = vmatpush2.xpose.msra.mxu0 0.0
    %270 = vmatprep.subr.mxu0 0.0
    %271 = vmatpush2.xpose.msra.mxu0 0.0
    %272 = vmatprep.subr.mxu0 0.0
    %273 = vmatpush2.xpose.msra.mxu0 0.0
    %274 = vmatprep.subr.mxu0 0.0
    %275 = vmatpush2.xpose.msra.mxu0 0.0
    %276 = vmatprep.subr.mxu0 0.0
    %277 = vmatpush2.xpose.msra.mxu0 0.0
    %278 = vmatprep.subr.mxu0 0.0
    %279 = vmatpush2.xpose.msra.mxu0 0.0
    %280 = vmatprep.subr.mxu0 0.0
    %281 = vmatpush2.xpose.msra.mxu0 0.0
    %282 = vmatprep.subr.mxu0 0.0
    %283 = vmatpush2.xpose.msra.mxu0 0.0
    %284 = vmatprep.mubr.f32.mxu0 0.0
    %285 = vmatmul.mubr.f32.gmra.mxu0 %v206
    %v286 = vpop.f32.mrf.mxu0
    %v287 = vadd.f32 0.0, %v286
    %v288 = vpop.f32.mrf.mxu0
    %289 = vmatprep.mubr.f32.mxu0 0.0
    %290 = vmatmul.mubr.f32.gmra.mxu0 %v209
    %v291 = vpop.f32.mrf.mxu0
    %v292 = vadd.f32 0.0, %v291
    %v293 = vpop.f32.mrf.mxu0
    %294 = vmatprep.mubr.f32.mxu0 0.0
    %295 = vmatmul.mubr.f32.gmra.mxu0 %v212
    %v296 = vpop.f32.mrf.mxu0
    %v297 = vadd.f32 0.0, %v296
    %v298 = vpop.f32.mrf.mxu0
    %299 = vmatprep.mubr.f32.mxu0 0.0
    %300 = vmatmul.mubr.f32.gmra.mxu0 %v215
    %v301 = vpop.f32.mrf.mxu0
    %v302 = vadd.f32 0.0, %v301
    %v303 = vpop.f32.mrf.mxu0
    %304 = vdwg.mxu0
    %vm305 = vcmp.eq.f32.partialorder %v160, 0.0
    %v306 = vsel %vm305, 1, 0
    %v307 = vcvt.s32.f32 %v306
    %v308 = vmul.f32 %v307, %v287
    %vm309 = vcmask 35840
    %v310 = vsel %vm309, %v308, 0.0
    %311 = vadd.xlane.f32.xlu0 %v310
    %v312 = vpop.xlane.xlu0 %311
    %vm313 = vcmp.eq.f32.partialorder %v160, %v312
    %v314 = vsel %vm313, 1, 0
    %v315 = vcvt.s32.f32 %v314
    %v317 = vrot.slane %v287, 4
    %v319 = vmul.f32 %v315, %v317
    %v320 = vsel %vm309, %v319, 0.0
    %321 = vadd.xlane.f32.xlu0 %v320
    %v322 = vpop.xlane.xlu0 %321
    %vm323 = vcmp.eq.f32.partialorder %v160, %v322
    %v324 = vsel %vm323, 1, 0
    %v325 = vcvt.s32.f32 %v324
    %v326 = vmul.f32 %v325, %v292
    %v327 = vsel %vm309, %v326, 0.0
    %328 = vadd.xlane.f32.xlu0 %v327
    %v329 = vpop.xlane.xlu0 %328
    %vm330 = vcmp.eq.f32.partialorder %v160, %v329
    %v331 = vsel %vm330, 1, 0
    %v332 = vcvt.s32.f32 %v331
    %v334 = vrot.slane %v292, 4
    %v336 = vmul.f32 %v332, %v334
    %v337 = vsel %vm309, %v336, 0.0
    %338 = vadd.xlane.f32.xlu0 %v337
    %v339 = vpop.xlane.xlu0 %338
    %vm340 = vcmp.eq.f32.partialorder %v160, %v339
    %v341 = vsel %vm340, 1, 0
    %v342 = vcvt.s32.f32 %v341
    %v343 = vmul.f32 %v342, %v297
    %v344 = vsel %vm309, %v343, 0.0
    %345 = vadd.xlane.f32.xlu0 %v344
    %v346 = vpop.xlane.xlu0 %345
    %vm347 = vcmp.eq.f32.partialorder %v160, %v346
    %v348 = vsel %vm347, 1, 0
    %v349 = vcvt.s32.f32 %v348
    %v351 = vrot.slane %v297, 4
    %v353 = vmul.f32 %v349, %v351
    %v354 = vsel %vm309, %v353, 0.0
    %355 = vadd.xlane.f32.xlu0 %v354
    %v356 = vpop.xlane.xlu0 %355
    %vm357 = vcmp.eq.f32.partialorder %v160, %v356
    %v358 = vsel %vm357, 1, 0
    %v359 = vcvt.s32.f32 %v358
    %v360 = vmul.f32 %v359, %v302
    %v361 = vsel %vm309, %v360, 0.0
    %362 = vadd.xlane.f32.xlu0 %v361
    %v363 = vpop.xlane.xlu0 %362
    %vm364 = vcmp.eq.f32.partialorder %v160, %v363
    %v365 = vsel %vm364, 1, 0
    %v366 = vcvt.s32.f32 %v365
    %v368 = vrot.slane %v302, 4
    %v370 = vmul.f32 %v366, %v368
    %v371 = vsel %vm309, %v370, 0.0
    %372 = vadd.xlane.f32.xlu0 %v371
    %v373 = vpop.xlane.xlu0 %372
    %vm374 = vcmp.eq.f32.partialorder %v160, %v373
    %v375 = vsel %vm374, 1, 0
    %v376 = vcvt.s32.f32 %v375
    %v377 = vmul.f32 %v376, %v160
    %v378 = vsel %vm309, %v377, 0.0
    %379 = vadd.xlane.f32.xlu0 %v378
    %v380 = vpop.xlane.xlu0 %379
    %v381 = vcvt.f32.s32.to.zero.pseudo %v380
    %vm382 = vcmask 3072
    %383 = vst.msk [vmem:[%s10] sm:$0xf] %vm382, %v381
    %v385 = vrot.slane %v325, 4
    %v388 = vrot.slane %v342, 4
    %v391 = vrot.slane %v359, 4
    %v394 = vrot.slane %v376, 4
    %vm396 = vcmask 1043456
    %v397 = vsel %vm396, %v315, %v385
    %v398 = vsel %vm396, %v332, %v388
    %v399 = vsel %vm396, %v349, %v391
    %v400 = vsel %vm396, %v366, %v394
    %vm401 = vcmask 39936
    %v403 = vsel %vm401, %v397, 0
    %v406 = vsel %vm401, %v398, 0
    %v409 = vsel %vm401, %v399, 0
    %v412 = vsel %vm401, %v400, 0
    %vm414 = vcmask 1044480
    %v416 = vsel %vm414, %v49, 0
    %418 = vmatprep.subr.mxu0 0.0
    %419 = vmatpush1.msra.mxu0 0.0
    %420 = vmatprep.subr.mxu0 0.0
    %421 = vmatpush1.msra.mxu0 0.0
    %422 = vmatprep.subr.mxu0 0.0
    %423 = vmatpush1.msra.mxu0 0.0
    %424 = vmatprep.subr.mxu0 0.0
    %425 = vmatpush1.msra.mxu0 0.0
    %426 = vmatprep.subr.mxu0 0.0
    %427 = vmatpush1.msra.mxu0 0.0
    %428 = vmatprep.subr.mxu0 0.0
    %429 = vmatpush1.msra.mxu0 0.0
    %430 = vmatprep.subr.mxu0 0.0
    %431 = vmatpush1.msra.mxu0 0.0
    %432 = vmatprep.subr.mxu0 0.0
    %433 = vmatpush1.msra.mxu0 0.0
    %434 = vmatprep.subr.mxu0 0.0
    %435 = vmatpush1.msra.mxu0 0.0
    %436 = vmatprep.subr.mxu0 0.0
    %437 = vmatpush1.msra.mxu0 0.0
    %438 = vmatprep.subr.mxu0 0.0
    %439 = vmatpush1.msra.mxu0 0.0
    %440 = vmatprep.subr.mxu0 0.0
    %441 = vmatpush1.msra.mxu0 0.0
    %442 = vmatprep.subr.mxu0 0.0
    %443 = vmatpush1.msra.mxu0 0.0
    %444 = vmatprep.subr.mxu0 0.0
    %445 = vmatpush1.msra.mxu0 0.0
    %446 = vmatprep.subr.mxu0 0.0
    %447 = vmatpush1.msra.mxu0 0.0
    %448 = vmatprep.subr.mxu0 0.0
    %449 = vmatpush1.msra.mxu0 %v416
    %450 = vmatprep.subr.mxu0 0.0
    %451 = vmatpush2.msra.mxu0 0.0
    %452 = vmatprep.subr.mxu0 0.0
    %453 = vmatpush2.msra.mxu0 0.0
    %454 = vmatprep.subr.mxu0 0.0
    %455 = vmatpush2.msra.mxu0 0.0
    %456 = vmatprep.subr.mxu0 0.0
    %457 = vmatpush2.msra.mxu0 0.0
    %458 = vmatprep.subr.mxu0 0.0
    %459 = vmatpush2.msra.mxu0 0.0
    %460 = vmatprep.subr.mxu0 0.0
    %461 = vmatpush2.msra.mxu0 0.0
    %462 = vmatprep.subr.mxu0 0.0
    %463 = vmatpush2.msra.mxu0 0.0
    %464 = vmatprep.subr.mxu0 0.0
    %465 = vmatpush2.msra.mxu0 0.0
    %466 = vmatprep.subr.mxu0 0.0
    %467 = vmatpush2.msra.mxu0 0.0
    %468 = vmatprep.subr.mxu0 0.0
    %469 = vmatpush2.msra.mxu0 0.0
    %470 = vmatprep.subr.mxu0 0.0
    %471 = vmatpush2.msra.mxu0 0.0
    %472 = vmatprep.subr.mxu0 0.0
    %473 = vmatpush2.msra.mxu0 0.0
    %474 = vmatprep.subr.mxu0 0.0
    %475 = vmatpush2.msra.mxu0 0.0
    %476 = vmatprep.subr.mxu0 0.0
    %477 = vmatpush2.msra.mxu0 0.0
    %478 = vmatprep.subr.mxu0 0.0
    %479 = vmatpush2.msra.mxu0 0.0
    %480 = vmatprep.subr.mxu0 0.0
    %481 = vmatpush2.msra.mxu0 0.0
    %482 = vmatprep.mubr.f32.mxu0 0.0
    %483 = vmatmul.mubr.f32.gmra.mxu0 %v403
    %v484 = vpop.f32.mrf.mxu0
    %v485 = vadd.f32 0.0, %v484
    %v486 = vpop.f32.mrf.mxu0
    %487 = vmatprep.mubr.f32.mxu0 0.0
    %488 = vmatmul.mubr.f32.gmra.mxu0 %v406
    %v489 = vpop.f32.mrf.mxu0
    %v490 = vadd.f32 0.0, %v489
    %v491 = vpop.f32.mrf.mxu0
    %492 = vmatprep.mubr.f32.mxu0 0.0
    %493 = vmatmul.mubr.f32.gmra.mxu0 %v409
    %v494 = vpop.f32.mrf.mxu0
    %v495 = vadd.f32 0.0, %v494
    %v496 = vpop.f32.mrf.mxu0
    %497 = vmatprep.mubr.f32.mxu0 0.0
    %498 = vmatmul.mubr.f32.gmra.mxu0 %v412
    %v499 = vpop.f32.mrf.mxu0
    %v500 = vadd.f32 0.0, %v499
    %v501 = vpop.f32.mrf.mxu0
    %502 = vdwg.mxu0
    %vm503 = vcmask 261120
    %v505 = vsel %vm503, 0.0, 0
    %507 = vmatprep.subr.mxu0 0.0
    %508 = vmatpush1.msra.mxu0 0.0
    %509 = vmatprep.subr.mxu0 0.0
    %510 = vmatpush1.msra.mxu0 0.0
    %511 = vmatprep.subr.mxu0 0.0
    %512 = vmatpush1.msra.mxu0 0.0
    %513 = vmatprep.subr.mxu0 0.0
    %514 = vmatpush1.msra.mxu0 0.0
    %515 = vmatprep.subr.mxu0 0.0
    %516 = vmatpush1.msra.mxu0 0.0
    %517 = vmatprep.subr.mxu0 0.0
    %518 = vmatpush1.msra.mxu0 0.0
    %519 = vmatprep.subr.mxu0 0.0
    %520 = vmatpush1.msra.mxu0 0.0
    %521 = vmatprep.subr.mxu0 0.0
    %522 = vmatpush1.msra.mxu0 0.0
    %523 = vmatprep.subr.mxu0 0.0
    %524 = vmatpush1.msra.mxu0 0.0
    %525 = vmatprep.subr.mxu0 0.0
    %526 = vmatpush1.msra.mxu0 0.0
    %527 = vmatprep.subr.mxu0 0.0
    %528 = vmatpush1.msra.mxu0 0.0
    %529 = vmatprep.subr.mxu0 0.0
    %530 = vmatpush1.msra.mxu0 0.0
    %531 = vmatprep.subr.mxu0 0.0
    %532 = vmatpush1.msra.mxu0 %v41
    %533 = vmatprep.subr.mxu0 0.0
    %534 = vmatpush1.msra.mxu0 %v40
    %535 = vmatprep.subr.mxu0 0.0
    %536 = vmatpush1.msra.mxu0 %v39
    %537 = vmatprep.subr.mxu0 0.0
    %538 = vmatpush1.msra.mxu0 %v38
    %539 = vmatprep.subr.mxu0 0.0
    %540 = vmatpush2.msra.mxu0 0.0
    %541 = vmatprep.subr.mxu0 0.0
    %542 = vmatpush2.msra.mxu0 0.0
    %543 = vmatprep.subr.mxu0 0.0
    %544 = vmatpush2.msra.mxu0 0.0
    %545 = vmatprep.subr.mxu0 0.0
    %546 = vmatpush2.msra.mxu0 0.0
    %547 = vmatprep.subr.mxu0 0.0
    %548 = vmatpush2.msra.mxu0 0.0
    %549 = vmatprep.subr.mxu0 0.0
    %550 = vmatpush2.msra.mxu0 0.0
    %551 = vmatprep.subr.mxu0 0.0
    %552 = vmatpush2.msra.mxu0 0.0
    %553 = vmatprep.subr.mxu0 0.0
    %554 = vmatpush2.msra.mxu0 0.0
    %555 = vmatprep.subr.mxu0 0.0
    %556 = vmatpush2.msra.mxu0 0.0
    %557 = vmatprep.subr.mxu0 0.0
    %558 = vmatpush2.msra.mxu0 0.0
    %559 = vmatprep.subr.mxu0 0.0
    %560 = vmatpush2.msra.mxu0 0.0
    %561 = vmatprep.subr.mxu0 0.0
    %562 = vmatpush2.msra.mxu0 0.0
    %563 = vmatprep.subr.mxu0 0.0
    %564 = vmatpush2.msra.mxu0 0.0
    %565 = vmatprep.subr.mxu0 0.0
    %566 = vmatpush2.msra.mxu0 0.0
    %567 = vmatprep.subr.mxu0 0.0
    %568 = vmatpush2.msra.mxu0 0.0
    %569 = vmatprep.subr.mxu0 0.0
    %570 = vmatpush2.msra.mxu0 0.0
    %571 = vmatprep.mubr.f32.mxu0 0.0
    %572 = vmatmul.mubr.f32.gmra.mxu0 %v505
    %v573 = vpop.f32.mrf.mxu0
    %v574 = vadd.f32 0.0, %v573
    %v575 = vpop.f32.mrf.mxu0
    %576 = vdwg.mxu0
    %v577 = vadd.f32 %v140, %v574
    %v578 = vtanh.pop %v577
    %v580 = vsel %vm503, %v578, 0
    %582 = vmatprep.subr.mxu0 0.0
    %583 = vmatpush1.msra.mxu0 0.0
    %584 = vmatprep.subr.mxu0 0.0
    %585 = vmatpush1.msra.mxu0 0.0
    %586 = vmatprep.subr.mxu0 0.0
    %587 = vmatpush1.msra.mxu0 0.0
    %588 = vmatprep.subr.mxu0 0.0
    %589 = vmatpush1.msra.mxu0 0.0
    %590 = vmatprep.subr.mxu0 0.0
    %591 = vmatpush1.msra.mxu0 0.0
    %592 = vmatprep.subr.mxu0 0.0
    %593 = vmatpush1.msra.mxu0 0.0
    %594 = vmatprep.subr.mxu0 0.0
    %595 = vmatpush1.msra.mxu0 0.0
    %596 = vmatprep.subr.mxu0 0.0
    %597 = vmatpush1.msra.mxu0 0.0
    %598 = vmatprep.subr.mxu0 0.0
    %599 = vmatpush1.msra.mxu0 0.0
    %600 = vmatprep.subr.mxu0 0.0
    %601 = vmatpush1.msra.mxu0 0.0
    %602 = vmatprep.subr.mxu0 0.0
    %603 = vmatpush1.msra.mxu0 0.0
    %604 = vmatprep.subr.mxu0 0.0
    %605 = vmatpush1.msra.mxu0 0.0
    %606 = vmatprep.subr.mxu0 0.0
    %607 = vmatpush1.msra.mxu0 %v41
    %608 = vmatprep.subr.mxu0 0.0
    %609 = vmatpush1.msra.mxu0 %v40
    %610 = vmatprep.subr.mxu0 0.0
    %611 = vmatpush1.msra.mxu0 %v39
    %612 = vmatprep.subr.mxu0 0.0
    %613 = vmatpush1.msra.mxu0 %v38
    %614 = vmatprep.subr.mxu0 0.0
    %615 = vmatpush2.msra.mxu0 0.0
    %616 = vmatprep.subr.mxu0 0.0
    %617 = vmatpush2.msra.mxu0 0.0
    %618 = vmatprep.subr.mxu0 0.0
    %619 = vmatpush2.msra.mxu0 0.0
    %620 = vmatprep.subr.mxu0 0.0
    %621 = vmatpush2.msra.mxu0 0.0
    %622 = vmatprep.subr.mxu0 0.0
    %623 = vmatpush2.msra.mxu0 0.0
    %624 = vmatprep.subr.mxu0 0.0
    %625 = vmatpush2.msra.mxu0 0.0
    %626 = vmatprep.subr.mxu0 0.0
    %627 = vmatpush2.msra.mxu0 0.0
    %628 = vmatprep.subr.mxu0 0.0
    %629 = vmatpush2.msra.mxu0 0.0
    %630 = vmatprep.subr.mxu0 0.0
    %631 = vmatpush2.msra.mxu0 0.0
    %632 = vmatprep.subr.mxu0 0.0
    %633 = vmatpush2.msra.mxu0 0.0
    %634 = vmatprep.subr.mxu0 0.0
    %635 = vmatpush2.msra.mxu0 0.0
    %636 = vmatprep.subr.mxu0 0.0
    %637 = vmatpush2.msra.mxu0 0.0
    %638 = vmatprep.subr.mxu0 0.0
    %639 = vmatpush2.msra.mxu0 0.0
    %640 = vmatprep.subr.mxu0 0.0
    %641 = vmatpush2.msra.mxu0 0.0
    %642 = vmatprep.subr.mxu0 0.0
    %643 = vmatpush2.msra.mxu0 0.0
    %644 = vmatprep.subr.mxu0 0.0
    %645 = vmatpush2.msra.mxu0 0.0
    %646 = vmatprep.mubr.f32.mxu0 0.0
    %647 = vmatmul.mubr.f32.gmra.mxu0 %v580
    %v648 = vpop.f32.mrf.mxu0
    %v649 = vadd.f32 0.0, %v648
    %v650 = vpop.f32.mrf.mxu0
    %651 = vdwg.mxu0
    %v653 = vrot.slane %v649, 4
    %v655 = vadd.f32 %v140, %v653
    %v656 = vtanh.pop %v655
    %v658 = vrot.slane %v656, 4
    %v659 = vsel %vm503, %v658, 0
    %661 = vmatprep.subr.mxu0 0.0
    %662 = vmatpush1.msra.mxu0 0.0
    %663 = vmatprep.subr.mxu0 0.0
    %664 = vmatpush1.msra.mxu0 0.0
    %665 = vmatprep.subr.mxu0 0.0
    %666 = vmatpush1.msra.mxu0 0.0
    %667 = vmatprep.subr.mxu0 0.0
    %668 = vmatpush1.msra.mxu0 0.0
    %669 = vmatprep.subr.mxu0 0.0
    %670 = vmatpush1.msra.mxu0 0.0
    %671 = vmatprep.subr.mxu0 0.0
    %672 = vmatpush1.msra.mxu0 0.0
    %673 = vmatprep.subr.mxu0 0.0
    %674 = vmatpush1.msra.mxu0 0.0
    %675 = vmatprep.subr.mxu0 0.0
    %676 = vmatpush1.msra.mxu0 0.0
    %677 = vmatprep.subr.mxu0 0.0
    %678 = vmatpush1.msra.mxu0 0.0
    %679 = vmatprep.subr.mxu0 0.0
    %680 = vmatpush1.msra.mxu0 0.0
    %681 = vmatprep.subr.mxu0 0.0
    %682 = vmatpush1.msra.mxu0 0.0
    %683 = vmatprep.subr.mxu0 0.0
    %684 = vmatpush1.msra.mxu0 0.0
    %685 = vmatprep.subr.mxu0 0.0
    %686 = vmatpush1.msra.mxu0 %v41
    %687 = vmatprep.subr.mxu0 0.0
    %688 = vmatpush1.msra.mxu0 %v40
    %689 = vmatprep.subr.mxu0 0.0
    %690 = vmatpush1.msra.mxu0 %v39
    %691 = vmatprep.subr.mxu0 0.0
    %692 = vmatpush1.msra.mxu0 %v38
    %693 = vmatprep.subr.mxu0 0.0
    %694 = vmatpush2.msra.mxu0 0.0
    %695 = vmatprep.subr.mxu0 0.0
    %696 = vmatpush2.msra.mxu0 0.0
    %697 = vmatprep.subr.mxu0 0.0
    %698 = vmatpush2.msra.mxu0 0.0
    %699 = vmatprep.subr.mxu0 0.0
    %700 = vmatpush2.msra.mxu0 0.0
    %701 = vmatprep.subr.mxu0 0.0
    %702 = vmatpush2.msra.mxu0 0.0
    %703 = vmatprep.subr.mxu0 0.0
    %704 = vmatpush2.msra.mxu0 0.0
    %705 = vmatprep.subr.mxu0 0.0
    %706 = vmatpush2.msra.mxu0 0.0
    %707 = vmatprep.subr.mxu0 0.0
    %708 = vmatpush2.msra.mxu0 0.0
    %709 = vmatprep.subr.mxu0 0.0
    %710 = vmatpush2.msra.mxu0 0.0
    %711 = vmatprep.subr.mxu0 0.0
    %712 = vmatpush2.msra.mxu0 0.0
    %713 = vmatprep.subr.mxu0 0.0
    %714 = vmatpush2.msra.mxu0 0.0
    %715 = vmatprep.subr.mxu0 0.0
    %716 = vmatpush2.msra.mxu0 0.0
    %717 = vmatprep.subr.mxu0 0.0
    %718 = vmatpush2.msra.mxu0 0.0
    %719 = vmatprep.subr.mxu0 0.0
    %720 = vmatpush2.msra.mxu0 0.0
    %721 = vmatprep.subr.mxu0 0.0
    %722 = vmatpush2.msra.mxu0 0.0
    %723 = vmatprep.subr.mxu0 0.0
    %724 = vmatpush2.msra.mxu0 0.0
    %725 = vmatprep.mubr.f32.mxu0 0.0
    %726 = vmatmul.mubr.f32.gmra.mxu0 %v659
    %v727 = vpop.f32.mrf.mxu0
    %v728 = vadd.f32 0.0, %v727
    %v729 = vpop.f32.mrf.mxu0
    %730 = vdwg.mxu0
    %v731 = vadd.f32 %v145, %v728
    %v732 = vtanh.pop %v731
    %v734 = vsel %vm503, %v732, 0
    %736 = vmatprep.subr.mxu0 0.0
    %737 = vmatpush1.msra.mxu0 0.0
    %738 = vmatprep.subr.mxu0 0.0
    %739 = vmatpush1.msra.mxu0 0.0
    %740 = vmatprep.subr.mxu0 0.0
    %741 = vmatpush1.msra.mxu0 0.0
    %742 = vmatprep.subr.mxu0 0.0
    %743 = vmatpush1.msra.mxu0 0.0
    %744 = vmatprep.subr.mxu0 0.0
    %745 = vmatpush1.msra.mxu0 0.0
    %746 = vmatprep.subr.mxu0 0.0
    %747 = vmatpush1.msra.mxu0 0.0
    %748 = vmatprep.subr.mxu0 0.0
    %749 = vmatpush1.msra.mxu0 0.0
    %750 = vmatprep.subr.mxu0 0.0
    %751 = vmatpush1.msra.mxu0 0.0
    %752 = vmatprep.subr.mxu0 0.0
    %753 = vmatpush1.msra.mxu0 0.0
    %754 = vmatprep.subr.mxu0 0.0
    %755 = vmatpush1.msra.mxu0 0.0
    %756 = vmatprep.subr.mxu0 0.0
    %757 = vmatpush1.msra.mxu0 0.0
    %758 = vmatprep.subr.mxu0 0.0
    %759 = vmatpush1.msra.mxu0 0.0
    %760 = vmatprep.subr.mxu0 0.0
    %761 = vmatpush1.msra.mxu0 %v41
    %762 = vmatprep.subr.mxu0 0.0
    %763 = vmatpush1.msra.mxu0 %v40
    %764 = vmatprep.subr.mxu0 0.0
    %765 = vmatpush1.msra.mxu0 %v39
    %766 = vmatprep.subr.mxu0 0.0
    %767 = vmatpush1.msra.mxu0 %v38
    %768 = vmatprep.subr.mxu0 0.0
    %769 = vmatpush2.msra.mxu0 0.0
    %770 = vmatprep.subr.mxu0 0.0
    %771 = vmatpush2.msra.mxu0 0.0
    %772 = vmatprep.subr.mxu0 0.0
    %773 = vmatpush2.msra.mxu0 0.0
    %774 = vmatprep.subr.mxu0 0.0
    %775 = vmatpush2.msra.mxu0 0.0
    %776 = vmatprep.subr.mxu0 0.0
    %777 = vmatpush2.msra.mxu0 0.0
    %778 = vmatprep.subr.mxu0 0.0
    %779 = vmatpush2.msra.mxu0 0.0
    %780 = vmatprep.subr.mxu0 0.0
    %781 = vmatpush2.msra.mxu0 0.0
    %782 = vmatprep.subr.mxu0 0.0
    %783 = vmatpush2.msra.mxu0 0.0
    %784 = vmatprep.subr.mxu0 0.0
    %785 = vmatpush2.msra.mxu0 0.0
    %786 = vmatprep.subr.mxu0 0.0
    %787 = vmatpush2.msra.mxu0 0.0
    %788 = vmatprep.subr.mxu0 0.0
    %789 = vmatpush2.msra.mxu0 0.0
    %790 = vmatprep.subr.mxu0 0.0
    %791 = vmatpush2.msra.mxu0 0.0
    %792 = vmatprep.subr.mxu0 0.0
    %793 = vmatpush2.msra.mxu0 0.0
    %794 = vmatprep.subr.mxu0 0.0
    %795 = vmatpush2.msra.mxu0 0.0
    %796 = vmatprep.subr.mxu0 0.0
    %797 = vmatpush2.msra.mxu0 0.0
    %798 = vmatprep.subr.mxu0 0.0
    %799 = vmatpush2.msra.mxu0 0.0
    %800 = vmatprep.mubr.f32.mxu0 0.0
    %801 = vmatmul.mubr.f32.gmra.mxu0 %v734
    %v802 = vpop.f32.mrf.mxu0
    %v803 = vadd.f32 0.0, %v802
    %v804 = vpop.f32.mrf.mxu0
    %805 = vdwg.mxu0
    %v807 = vrot.slane %v803, 4
    %v809 = vadd.f32 %v145, %v807
    %v810 = vtanh.pop %v809
    %v812 = vrot.slane %v810, 4
    %v813 = vsel %vm503, %v812, 0
    %815 = vmatprep.subr.mxu0 0.0
    %816 = vmatpush1.msra.mxu0 0.0
    %817 = vmatprep.subr.mxu0 0.0
    %818 = vmatpush1.msra.mxu0 0.0
    %819 = vmatprep.subr.mxu0 0.0
    %820 = vmatpush1.msra.mxu0 0.0
    %821 = vmatprep.subr.mxu0 0.0
    %822 = vmatpush1.msra.mxu0 0.0
    %823 = vmatprep.subr.mxu0 0.0
    %824 = vmatpush1.msra.mxu0 0.0
    %825 = vmatprep.subr.mxu0 0.0
    %826 = vmatpush1.msra.mxu0 0.0
    %827 = vmatprep.subr.mxu0 0.0
    %828 = vmatpush1.msra.mxu0 0.0
    %829 = vmatprep.subr.mxu0 0.0
    %830 = vmatpush1.msra.mxu0 0.0
    %831 = vmatprep.subr.mxu0 0.0
    %832 = vmatpush1.msra.mxu0 0.0
    %833 = vmatprep.subr.mxu0 0.0
    %834 = vmatpush1.msra.mxu0 0.0
    %835 = vmatprep.subr.mxu0 0.0
    %836 = vmatpush1.msra.mxu0 0.0
    %837 = vmatprep.subr.mxu0 0.0
    %838 = vmatpush1.msra.mxu0 0.0
    %839 = vmatprep.subr.mxu0 0.0
    %840 = vmatpush1.msra.mxu0 %v41
    %841 = vmatprep.subr.mxu0 0.0
    %842 = vmatpush1.msra.mxu0 %v40
    %843 = vmatprep.subr.mxu0 0.0
    %844 = vmatpush1.msra.mxu0 %v39
    %845 = vmatprep.subr.mxu0 0.0
    %846 = vmatpush1.msra.mxu0 %v38
    %847 = vmatprep.subr.mxu0 0.0
    %848 = vmatpush2.msra.mxu0 0.0
    %849 = vmatprep.subr.mxu0 0.0
    %850 = vmatpush2.msra.mxu0 0.0
    %851 = vmatprep.subr.mxu0 0.0
    %852 = vmatpush2.msra.mxu0 0.0
    %853 = vmatprep.subr.mxu0 0.0
    %854 = vmatpush2.msra.mxu0 0.0
    %855 = vmatprep.subr.mxu0 0.0
    %856 = vmatpush2.msra.mxu0 0.0
    %857 = vmatprep.subr.mxu0 0.0
    %858 = vmatpush2.msra.mxu0 0.0
    %859 = vmatprep.subr.mxu0 0.0
    %860 = vmatpush2.msra.mxu0 0.0
    %861 = vmatprep.subr.mxu0 0.0
    %862 = vmatpush2.msra.mxu0 0.0
    %863 = vmatprep.subr.mxu0 0.0
    %864 = vmatpush2.msra.mxu0 0.0
    %865 = vmatprep.subr.mxu0 0.0
    %866 = vmatpush2.msra.mxu0 0.0
    %867 = vmatprep.subr.mxu0 0.0
    %868 = vmatpush2.msra.mxu0 0.0
    %869 = vmatprep.subr.mxu0 0.0
    %870 = vmatpush2.msra.mxu0 0.0
    %871 = vmatprep.subr.mxu0 0.0
    %872 = vmatpush2.msra.mxu0 0.0
    %873 = vmatprep.subr.mxu0 0.0
    %874 = vmatpush2.msra.mxu0 0.0
    %875 = vmatprep.subr.mxu0 0.0
    %876 = vmatpush2.msra.mxu0 0.0
    %877 = vmatprep.subr.mxu0 0.0
    %878 = vmatpush2.msra.mxu0 0.0
    %879 = vmatprep.mubr.f32.mxu0 0.0
    %880 = vmatmul.mubr.f32.gmra.mxu0 %v813
    %v881 = vpop.f32.mrf.mxu0
    %v882 = vadd.f32 0.0, %v881
    %v883 = vpop.f32.mrf.mxu0
    %884 = vdwg.mxu0
    %v885 = vadd.f32 %v150, %v882
    %v886 = vtanh.pop %v885
    %v888 = vsel %vm503, %v886, 0
    %890 = vmatprep.subr.mxu0 0.0
    %891 = vmatpush1.msra.mxu0 0.0
    %892 = vmatprep.subr.mxu0 0.0
    %893 = vmatpush1.msra.mxu0 0.0
    %894 = vmatprep.subr.mxu0 0.0
    %895 = vmatpush1.msra.mxu0 0.0
    %896 = vmatprep.subr.mxu0 0.0
    %897 = vmatpush1.msra.mxu0 0.0
    %898 = vmatprep.subr.mxu0 0.0
    %899 = vmatpush1.msra.mxu0 0.0
    %900 = vmatprep.subr.mxu0 0.0
    %901 = vmatpush1.msra.mxu0 0.0
    %902 = vmatprep.subr.mxu0 0.0
    %903 = vmatpush1.msra.mxu0 0.0
    %904 = vmatprep.subr.mxu0 0.0
    %905 = vmatpush1.msra.mxu0 0.0
    %906 = vmatprep.subr.mxu0 0.0
    %907 = vmatpush1.msra.mxu0 0.0
    %908 = vmatprep.subr.mxu0 0.0
    %909 = vmatpush1.msra.mxu0 0.0
    %910 = vmatprep.subr.mxu0 0.0
    %911 = vmatpush1.msra.mxu0 0.0
    %912 = vmatprep.subr.mxu0 0.0
    %913 = vmatpush1.msra.mxu0 0.0
    %914 = vmatprep.subr.mxu0 0.0
    %915 = vmatpush1.msra.mxu0 %v41
    %916 = vmatprep.subr.mxu0 0.0
    %917 = vmatpush1.msra.mxu0 %v40
    %918 = vmatprep.subr.mxu0 0.0
    %919 = vmatpush1.msra.mxu0 %v39
    %920 = vmatprep.subr.mxu0 0.0
    %921 = vmatpush1.msra.mxu0 %v38
    %922 = vmatprep.subr.mxu0 0.0
    %923 = vmatpush2.msra.mxu0 0.0
    %924 = vmatprep.subr.mxu0 0.0
    %925 = vmatpush2.msra.mxu0 0.0
    %926 = vmatprep.subr.mxu0 0.0
    %927 = vmatpush2.msra.mxu0 0.0
    %928 = vmatprep.subr.mxu0 0.0
    %929 = vmatpush2.msra.mxu0 0.0
    %930 = vmatprep.subr.mxu0 0.0
    %931 = vmatpush2.msra.mxu0 0.0
    %932 = vmatprep.subr.mxu0 0.0
    %933 = vmatpush2.msra.mxu0 0.0
    %934 = vmatprep.subr.mxu0 0.0
    %935 = vmatpush2.msra.mxu0 0.0
    %936 = vmatprep.subr.mxu0 0.0
    %937 = vmatpush2.msra.mxu0 0.0
    %938 = vmatprep.subr.mxu0 0.0
    %939 = vmatpush2.msra.mxu0 0.0
    %940 = vmatprep.subr.mxu0 0.0
    %941 = vmatpush2.msra.mxu0 0.0
    %942 = vmatprep.subr.mxu0 0.0
    %943 = vmatpush2.msra.mxu0 0.0
    %944 = vmatprep.subr.mxu0 0.0
    %945 = vmatpush2.msra.mxu0 0.0
    %946 = vmatprep.subr.mxu0 0.0
    %947 = vmatpush2.msra.mxu0 0.0
    %948 = vmatprep.subr.mxu0 0.0
    %949 = vmatpush2.msra.mxu0 0.0
    %950 = vmatprep.subr.mxu0 0.0
    %951 = vmatpush2.msra.mxu0 0.0
    %952 = vmatprep.subr.mxu0 0.0
    %953 = vmatpush2.msra.mxu0 0.0
    %954 = vmatprep.mubr.f32.mxu0 0.0
    %955 = vmatmul.mubr.f32.gmra.mxu0 %v888
    %v956 = vpop.f32.mrf.mxu0
    %v957 = vadd.f32 0.0, %v956
    %v958 = vpop.f32.mrf.mxu0
    %959 = vdwg.mxu0
    %v961 = vrot.slane %v957, 4
    %v963 = vadd.f32 %v150, %v961
    %v964 = vtanh.pop %v963
    %v966 = vrot.slane %v964, 4
    %v967 = vsel %vm503, %v966, 0
    %969 = vmatprep.subr.mxu0 0.0
    %970 = vmatpush1.msra.mxu0 0.0
    %971 = vmatprep.subr.mxu0 0.0
    %972 = vmatpush1.msra.mxu0 0.0
    %973 = vmatprep.subr.mxu0 0.0
    %974 = vmatpush1.msra.mxu0 0.0
    %975 = vmatprep.subr.mxu0 0.0
    %976 = vmatpush1.msra.mxu0 0.0
    %977 = vmatprep.subr.mxu0 0.0
    %978 = vmatpush1.msra.mxu0 0.0
    %979 = vmatprep.subr.mxu0 0.0
    %980 = vmatpush1.msra.mxu0 0.0
    %981 = vmatprep.subr.mxu0 0.0
    %982 = vmatpush1.msra.mxu0 0.0
    %983 = vmatprep.subr.mxu0 0.0
    %984 = vmatpush1.msra.mxu0 0.0
    %985 = vmatprep.subr.mxu0 0.0
    %986 = vmatpush1.msra.mxu0 0.0
    %987 = vmatprep.subr.mxu0 0.0
    %988 = vmatpush1.msra.mxu0 0.0
    %989 = vmatprep.subr.mxu0 0.0
    %990 = vmatpush1.msra.mxu0 0.0
    %991 = vmatprep.subr.mxu0 0.0
    %992 = vmatpush1.msra.mxu0 0.0
    %993 = vmatprep.subr.mxu0 0.0
    %994 = vmatpush1.msra.mxu0 %v41
    %995 = vmatprep.subr.mxu0 0.0
    %996 = vmatpush1.msra.mxu0 %v40
    %997 = vmatprep.subr.mxu0 0.0
    %998 = vmatpush1.msra.mxu0 %v39
    %999 = vmatprep.subr.mxu0 0.0
    %1000 = vmatpush1.msra.mxu0 %v38
    %1001 = vmatprep.subr.mxu0 0.0
    %1002 = vmatpush2.msra.mxu0 0.0
    %1003 = vmatprep.subr.mxu0 0.0
    %1004 = vmatpush2.msra.mxu0 0.0
    %1005 = vmatprep.subr.mxu0 0.0
    %1006 = vmatpush2.msra.mxu0 0.0
    %1007 = vmatprep.subr.mxu0 0.0
    %1008 = vmatpush2.msra.mxu0 0.0
    %1009 = vmatprep.subr.mxu0 0.0
    %1010 = vmatpush2.msra.mxu0 0.0
    %1011 = vmatprep.subr.mxu0 0.0
    %1012 = vmatpush2.msra.mxu0 0.0
    %1013 = vmatprep.subr.mxu0 0.0
    %1014 = vmatpush2.msra.mxu0 0.0
    %1015 = vmatprep.subr.mxu0 0.0
    %1016 = vmatpush2.msra.mxu0 0.0
    %1017 = vmatprep.subr.mxu0 0.0
    %1018 = vmatpush2.msra.mxu0 0.0
    %1019 = vmatprep.subr.mxu0 0.0
    %1020 = vmatpush2.msra.mxu0 0.0
    %1021 = vmatprep.subr.mxu0 0.0
    %1022 = vmatpush2.msra.mxu0 0.0
    %1023 = vmatprep.subr.mxu0 0.0
    %1024 = vmatpush2.msra.mxu0 0.0
    %1025 = vmatprep.subr.mxu0 0.0
    %1026 = vmatpush2.msra.mxu0 0.0
    %1027 = vmatprep.subr.mxu0 0.0
    %1028 = vmatpush2.msra.mxu0 0.0
    %1029 = vmatprep.subr.mxu0 0.0
    %1030 = vmatpush2.msra.mxu0 0.0
    %1031 = vmatprep.subr.mxu0 0.0
    %1032 = vmatpush2.msra.mxu0 0.0
    %1033 = vmatprep.mubr.f32.mxu0 0.0
    %1034 = vmatmul.mubr.f32.gmra.mxu0 %v967
    %v1035 = vpop.f32.mrf.mxu0
    %v1036 = vadd.f32 0.0, %v1035
    %v1037 = vpop.f32.mrf.mxu0
    %1038 = vdwg.mxu0
    %v1039 = vadd.f32 %v155, %v1036
    %v1040 = vtanh.pop %v1039
    %v1042 = vsel %vm503, %v1040, 0
    %1044 = vmatprep.subr.mxu0 0.0
    %1045 = vmatpush1.msra.mxu0 0.0
    %1046 = vmatprep.subr.mxu0 0.0
    %1047 = vmatpush1.msra.mxu0 0.0
    %1048 = vmatprep.subr.mxu0 0.0
    %1049 = vmatpush1.msra.mxu0 0.0
    %1050 = vmatprep.subr.mxu0 0.0
    %1051 = vmatpush1.msra.mxu0 0.0
    %1052 = vmatprep.subr.mxu0 0.0
    %1053 = vmatpush1.msra.mxu0 0.0
    %1054 = vmatprep.subr.mxu0 0.0
    %1055 = vmatpush1.msra.mxu0 0.0
    %1056 = vmatprep.subr.mxu0 0.0
    %1057 = vmatpush1.msra.mxu0 0.0
    %1058 = vmatprep.subr.mxu0 0.0
    %1059 = vmatpush1.msra.mxu0 0.0
    %1060 = vmatprep.subr.mxu0 0.0
    %1061 = vmatpush1.msra.mxu0 0.0
    %1062 = vmatprep.subr.mxu0 0.0
    %1063 = vmatpush1.msra.mxu0 0.0
    %1064 = vmatprep.subr.mxu0 0.0
    %1065 = vmatpush1.msra.mxu0 0.0
    %1066 = vmatprep.subr.mxu0 0.0
    %1067 = vmatpush1.msra.mxu0 0.0
    %1068 = vmatprep.subr.mxu0 0.0
    %1069 = vmatpush1.msra.mxu0 %v41
    %1070 = vmatprep.subr.mxu0 0.0
    %1071 = vmatpush1.msra.mxu0 %v40
    %1072 = vmatprep.subr.mxu0 0.0
    %1073 = vmatpush1.msra.mxu0 %v39
    %1074 = vmatprep.subr.mxu0 0.0
    %1075 = vmatpush1.msra.mxu0 %v38
    %1076 = vmatprep.subr.mxu0 0.0
    %1077 = vmatpush2.msra.mxu0 0.0
    %1078 = vmatprep.subr.mxu0 0.0
    %1079 = vmatpush2.msra.mxu0 0.0
    %1080 = vmatprep.subr.mxu0 0.0
    %1081 = vmatpush2.msra.mxu0 0.0
    %1082 = vmatprep.subr.mxu0 0.0
    %1083 = vmatpush2.msra.mxu0 0.0
    %1084 = vmatprep.subr.mxu0 0.0
    %1085 = vmatpush2.msra.mxu0 0.0
    %1086 = vmatprep.subr.mxu0 0.0
    %1087 = vmatpush2.msra.mxu0 0.0
    %1088 = vmatprep.subr.mxu0 0.0
    %1089 = vmatpush2.msra.mxu0 0.0
    %1090 = vmatprep.subr.mxu0 0.0
    %1091 = vmatpush2.msra.mxu0 0.0
    %1092 = vmatprep.subr.mxu0 0.0
    %1093 = vmatpush2.msra.mxu0 0.0
    %1094 = vmatprep.subr.mxu0 0.0
    %1095 = vmatpush2.msra.mxu0 0.0
    %1096 = vmatprep.subr.mxu0 0.0
    %1097 = vmatpush2.msra.mxu0 0.0
    %1098 = vmatprep.subr.mxu0 0.0
    %1099 = vmatpush2.msra.mxu0 0.0
    %1100 = vmatprep.subr.mxu0 0.0
    %1101 = vmatpush2.msra.mxu0 0.0
    %1102 = vmatprep.subr.mxu0 0.0
    %1103 = vmatpush2.msra.mxu0 0.0
    %1104 = vmatprep.subr.mxu0 0.0
    %1105 = vmatpush2.msra.mxu0 0.0
    %1106 = vmatprep.subr.mxu0 0.0
    %1107 = vmatpush2.msra.mxu0 0.0
    %1108 = vmatprep.mubr.f32.mxu0 0.0
    %1109 = vmatmul.mubr.f32.gmra.mxu0 %v1042
    %v1110 = vpop.f32.mrf.mxu0
    %v1111 = vadd.f32 0.0, %v1110
    %v1112 = vpop.f32.mrf.mxu0
    %1113 = vdwg.mxu0
    %v1115 = vrot.slane %v1111, 4
    %v1117 = vadd.f32 %v155, %v1115
    %v1118 = vtanh.pop %v1117
    %vm1119 = vcmask 261124
    %1120 = vst.msk [vmem:[#allocation2 - $0x4] sm:$0xf0] %vm1119, %v1118
    %v1121 = vsel %vm396, %v578, %v656
    %v1122 = vsel %vm396, %v732, %v810
    %v1123 = vsel %vm396, %v886, %v964
    %v1124 = vsel %vm396, %v1040, %v1118
    %v1126 = vlaneseq
    %v1127 = vshrl.u32 %v1126, 7
    %v1128 = vsub.s32 0, %v1127
    %v1129 = vrot.slane %v47, %v1128
    %v1132 = vsel %vm503, %v1121, 0
    %v1135 = vsel %vm503, %v1122, 0
    %v1138 = vsel %vm503, %v1123, 0
    %v1141 = vsel %vm503, %v1124, 0
    %1143 = vmatprep.subr.mxu0 0.0
    %1144 = vmatpush1.msra.mxu0 0.0
    %1145 = vmatprep.subr.mxu0 0.0
    %1146 = vmatpush1.msra.mxu0 0.0
    %1147 = vmatprep.subr.mxu0 0.0
    %1148 = vmatpush1.msra.mxu0 0.0
    %1149 = vmatprep.subr.mxu0 0.0
    %1150 = vmatpush1.msra.mxu0 0.0
    %1151 = vmatprep.subr.mxu0 0.0
    %1152 = vmatpush1.msra.mxu0 0.0
    %1153 = vmatprep.subr.mxu0 0.0
    %1154 = vmatpush1.msra.mxu0 0.0
    %1155 = vmatprep.subr.mxu0 0.0
    %1156 = vmatpush1.msra.mxu0 0.0
    %1157 = vmatprep.subr.mxu0 0.0
    %1158 = vmatpush1.msra.mxu0 0.0
    %1159 = vmatprep.subr.mxu0 0.0
    %1160 = vmatpush1.msra.mxu0 0.0
    %1161 = vmatprep.subr.mxu0 0.0
    %1162 = vmatpush1.msra.mxu0 0.0
    %1163 = vmatprep.subr.mxu0 0.0
    %1164 = vmatpush1.msra.mxu0 0.0
    %1165 = vmatprep.subr.mxu0 0.0
    %1166 = vmatpush1.msra.mxu0 0.0
    %1167 = vmatprep.subr.mxu0 0.0
    %1168 = vmatpush1.msra.mxu0 %v46
    %1169 = vmatprep.subr.mxu0 0.0
    %1170 = vmatpush1.msra.mxu0 %v45
    %1171 = vmatprep.subr.mxu0 0.0
    %1172 = vmatpush1.msra.mxu0 %v44
    %1173 = vmatprep.subr.mxu0 0.0
    %1174 = vmatpush1.msra.mxu0 %v43
    %1175 = vmatprep.subr.mxu0 0.0
    %1176 = vmatpush2.msra.mxu0 0.0
    %1177 = vmatprep.subr.mxu0 0.0
    %1178 = vmatpush2.msra.mxu0 0.0
    %1179 = vmatprep.subr.mxu0 0.0
    %1180 = vmatpush2.msra.mxu0 0.0
    %1181 = vmatprep.subr.mxu0 0.0
    %1182 = vmatpush2.msra.mxu0 0.0
    %1183 = vmatprep.subr.mxu0 0.0
    %1184 = vmatpush2.msra.mxu0 0.0
    %1185 = vmatprep.subr.mxu0 0.0
    %1186 = vmatpush2.msra.mxu0 0.0
    %1187 = vmatprep.subr.mxu0 0.0
    %1188 = vmatpush2.msra.mxu0 0.0
    %1189 = vmatprep.subr.mxu0 0.0
    %1190 = vmatpush2.msra.mxu0 0.0
    %1191 = vmatprep.subr.mxu0 0.0
    %1192 = vmatpush2.msra.mxu0 0.0
    %1193 = vmatprep.subr.mxu0 0.0
    %1194 = vmatpush2.msra.mxu0 0.0
    %1195 = vmatprep.subr.mxu0 0.0
    %1196 = vmatpush2.msra.mxu0 0.0
    %1197 = vmatprep.subr.mxu0 0.0
    %1198 = vmatpush2.msra.mxu0 0.0
    %1199 = vmatprep.subr.mxu0 0.0
    %1200 = vmatpush2.msra.mxu0 0.0
    %1201 = vmatprep.subr.mxu0 0.0
    %1202 = vmatpush2.msra.mxu0 0.0
    %1203 = vmatprep.subr.mxu0 0.0
    %1204 = vmatpush2.msra.mxu0 0.0
    %1205 = vmatprep.subr.mxu0 0.0
    %1206 = vmatpush2.msra.mxu0 0.0
    %1207 = vmatprep.mubr.f32.mxu0 0.0
    %1208 = vmatmul.mubr.f32.gmra.mxu0 %v1132
    %v1209 = vpop.f32.mrf.mxu0
    %v1210 = vadd.f32 %v1129, %v1209
    %v1211 = vpop.f32.mrf.mxu0
    %1212 = vmatprep.mubr.f32.mxu0 0.0
    %1213 = vmatmul.mubr.f32.gmra.mxu0 %v1135
    %v1214 = vpop.f32.mrf.mxu0
    %v1215 = vadd.f32 %v1129, %v1214
    %v1216 = vpop.f32.mrf.mxu0
    %1217 = vmatprep.mubr.f32.mxu0 0.0
    %1218 = vmatmul.mubr.f32.gmra.mxu0 %v1138
    %v1219 = vpop.f32.mrf.mxu0
    %v1220 = vadd.f32 %v1129, %v1219
    %v1221 = vpop.f32.mrf.mxu0
    %1222 = vmatprep.mubr.f32.mxu0 0.0
    %1223 = vmatmul.mubr.f32.gmra.mxu0 %v1141
    %v1224 = vpop.f32.mrf.mxu0
    %v1225 = vadd.f32 %v1129, %v1224
    %v1226 = vpop.f32.mrf.mxu0
    %1227 = vdwg.mxu0
    %v1228 = vsel %vm56, %v1210, -inf
    %1229 = vmax.xlane.f32.xlu0 %v1228
    %v1230 = vpop.xlane.xlu0 %1229
    %v1231 = vsel %vm56, %v1215, -inf
    %1232 = vmax.xlane.f32.xlu0 %v1231
    %v1233 = vpop.xlane.xlu0 %1232
    %v1234 = vsel %vm56, %v1220, -inf
    %1235 = vmax.xlane.f32.xlu0 %v1234
    %v1236 = vpop.xlane.xlu0 %1235
    %v1237 = vsel %vm56, %v1225, -inf
    %1238 = vmax.xlane.f32.xlu0 %v1237
    %v1239 = vpop.xlane.xlu0 %1238
    %v1240 = vsub.f32 %v1210, %v1230
    %v1241 = vsub.f32 %v1215, %v1233
    %v1242 = vsub.f32 %v1220, %v1236
    %v1243 = vsub.f32 %v1225, %v1239
    %v1244 = vmul.f32 %v1240, 1.442695
    %v1245 = vpow.pop %v1244
    %v1246 = vmul.f32 %v1241, 1.442695
    %v1247 = vpow.pop %v1246
    %v1248 = vmul.f32 %v1242, 1.442695
    %v1249 = vpow.pop %v1248
    %v1250 = vmul.f32 %v1243, 1.442695
    %v1251 = vpow.pop %v1250
    %v1252 = vsel %vm56, %v1245, 0.0
    %1253 = vadd.xlane.f32.xlu0 %v1252
    %v1254 = vpop.xlane.xlu0 %1253
    %v1255 = vsel %vm56, %v1247, 0.0
    %1256 = vadd.xlane.f32.xlu0 %v1255
    %v1257 = vpop.xlane.xlu0 %1256
    %v1258 = vsel %vm56, %v1249, 0.0
    %1259 = vadd.xlane.f32.xlu0 %v1258
    %v1260 = vpop.xlane.xlu0 %1259
    %v1261 = vsel %vm56, %v1251, 0.0
    %1262 = vadd.xlane.f32.xlu0 %v1261
    %v1263 = vpop.xlane.xlu0 %1262
    %v1264 = vrcp.pop %v1254
    %v1265 = vrcp.pop %v1257
    %v1266 = vrcp.pop %v1260
    %v1267 = vrcp.pop %v1263
    %v1268 = vmul.f32 %v1254, %v1264
    %v1269 = vmul.f32 %v1257, %v1265
    %v1270 = vmul.f32 %v1260, %v1266
    %v1271 = vmul.f32 %v1263, %v1267
    %v1272 = vsub.f32 2.0, %v1268
    %v1273 = vsub.f32 2.0, %v1269
    %v1274 = vsub.f32 2.0, %v1270
    %v1275 = vsub.f32 2.0, %v1271
    %v1276 = vmul.f32 %v1264, %v1272
    %v1277 = vmul.f32 %v1265, %v1273
    %v1278 = vmul.f32 %v1266, %v1274
    %v1279 = vmul.f32 %v1267, %v1275
    %v1280 = vmul.f32 %v1245, %v1276
    %v1281 = vmul.f32 %v1247, %v1277
    %v1282 = vmul.f32 %v1249, %v1278
    %v1283 = vmul.f32 %v1251, %v1279
    %v1284 = vmul.f32 %v1280, %v485
    %v1285 = vmul.f32 %v1281, %v490
    %v1286 = vmul.f32 %v1282, %v495
    %v1287 = vmul.f32 %v1283, %v500
    %1288 = vst.msk [vmem:[%s8] sm:$0xff] %vm56, %v1284
    %1289 = vst.msk [vmem:[%s8 + $0x8] sm:$0xff] %vm56, %v1285
    %1290 = vst.msk [vmem:[%s8 + $0x10] sm:$0xff] %vm56, %v1286
    %1291 = vst.msk [vmem:[%s8 + $0x18] sm:$0xff] %vm56, %v1287
    // Predicated region
    $region34: #{rnn_with_constraints_forward.1} parent=1 // pred_check
      _
    $region35: #{rnn_with_constraints_forward.1} parent=1 // pred_check_branch
      %1293 = sbr.rel (0) target = $region37
    $region36: #{rnn_with_constraints_forward.1} parent=1 // pred_region
      _
    $region37: #{rnn_with_constraints_forward.1} parent=1 // pred_fallthru
      _
    // Predicated region
    $region38: #{rnn_with_constraints_forward.1} parent=1 // pred_check
      _
    $region39: #{rnn_with_constraints_forward.1} parent=1 // pred_check_branch
      %1295 = sbr.rel (0) target = $region41
    $region40: #{rnn_with_constraints_forward.1} parent=1 // pred_region
      %s1297 = ssub.s32 64, 64
      %1298 = vsyncadd [#allocation3], %s1297
      %s1300 = sshll.u32 [#allocation2], 4
      %s1301 = int_to_ptr.vmem [resolvable:$true] %s1300
      %1303 = dma.vmem_to_hbm [thread:$0]  %s1301, 64, %s9, [#allocation3]
    $region41: #{rnn_with_constraints_forward.1} parent=1 // pred_fallthru
      _
    // Predicated region
    $region42: #{rnn_with_constraints_forward.1} parent=1 // pred_check
      _
    $region43: #{rnn_with_constraints_forward.1} parent=1 // pred_check_branch
      %1305 = sbr.rel (0) target = $region45
    $region44: #{rnn_with_constraints_forward.1} parent=1 // pred_region
      _
    $region45: #{rnn_with_constraints_forward.1} parent=1 // pred_fallthru
      _
    // Predicated region
    $region46: #{rnn_with_constraints_forward.1} parent=1 // pred_check
      _
    $region47: #{rnn_with_constraints_forward.1} parent=1 // pred_check_branch
      %1307 = sbr.rel (0) target = $region49
    $region48: #{rnn_with_constraints_forward.1} parent=1 // pred_region
      _
    $region49: #{rnn_with_constraints_forward.1} parent=1 // pred_fallthru
      _
    // Predicated region
    $region50: #{rnn_with_constraints_forward.1} parent=1 // pred_check
      _
    $region51: #{rnn_with_constraints_forward.1} parent=1 // pred_check_branch
      %1309 = sbr.rel (0) target = $region53
    $region52: #{rnn_with_constraints_forward.1} parent=1 // pred_region
      %1310 = dma.done [#allocation3], 64
    $region53: #{rnn_with_constraints_forward.1} parent=1 // pred_fallthru
      _
    // Predicated region
    $region54: #{rnn_with_constraints_forward.1} parent=1 // pred_check
      _
    $region55: #{rnn_with_constraints_forward.1} parent=1 // pred_check_branch
      %1312 = sbr.rel (0) target = $region57
    $region56: #{rnn_with_constraints_forward.1} parent=1 // pred_region
      _
    $region57: #{rnn_with_constraints_forward.1} parent=1 // pred_fallthru
      _
    %1313 = vsyncpa [#allocation3], 1

</llo_original>
